<compile_context>
chip_gen: v6e
topology: v6e:2x2x1
jax: 0.10.0
libtpu: 0.0.40
codegen_flags: <defaults>
</compile_context>

<pallas_src>
import numpy as np
import jax
import jax.numpy as jnp
from jax.experimental import pallas as pl
from jax.experimental.pallas import tpu as pltpu


# ----------------------------------------------------------------------------
# Pallas kernel: masked bidirectional LSTM + linear + tanh (single invocation)
# ----------------------------------------------------------------------------
def make_bilstm_kernel(T, B, E, H):
    G = 4 * H  # fused gate width (i, f, g, o)

    def kernel(x_ref, lens_ref,
               wih_f_ref, whh_f_ref, b_f_ref,
               wih_b_ref, whh_b_ref, b_b_ref,
               wout_ref, bout_ref,
               out_ref,
               pre_f_ref, pre_b_ref):
        # ---- hoisted input projection: one wide matmul per direction ----
        # (T, B, E) -> (T*B, E): merges leading dims only (B multiple of 8),
        # layout-preserving.
        x2d = x_ref[...].reshape(T * B, E)
        pre_f_ref[...] = (
            jnp.dot(x2d, wih_f_ref[...], preferred_element_type=jnp.float32)
            + b_f_ref[...]).reshape(T, B, G)
        pre_b_ref[...] = (
            jnp.dot(x2d, wih_b_ref[...], preferred_element_type=jnp.float32)
            + b_b_ref[...]).reshape(T, B, G)

        lens = lens_ref[...]          # (B, 1) int32, word (char) lengths
        whh_f = whh_f_ref[...]        # (H, 4H)
        whh_b = whh_b_ref[...]        # (H, 4H)

        def cell(pregate, h, c, whh):
            gates = pregate + jnp.dot(h, whh,
                                      preferred_element_type=jnp.float32)
            i = jax.nn.sigmoid(gates[:, 0 * H:1 * H])
            f = jax.nn.sigmoid(gates[:, 1 * H:2 * H])
            g = jnp.tanh(gates[:, 2 * H:3 * H])
            o = jax.nn.sigmoid(gates[:, 3 * H:4 * H])
            c_new = f * c + i * g
            h_new = o * jnp.tanh(c_new)
            return h_new, c_new

        def body(t, carry):
            h_f, c_f, h_b, c_b = carry
            tb = T - 1 - t
            # forward direction: char t, only while t < word_len
            hnf, cnf = cell(pre_f_ref[t], h_f, c_f, whh_f)
            # backward direction: char (T-1-t), only while it is a real char
            # -> starts at the last real char, ends at char 0 (packed-seq
            #    backward final hidden state)
            hnb, cnb = cell(pre_b_ref[tb], h_b, c_b, whh_b)
            mf = t < lens
            mb = tb < lens
            h_f = jnp.where(mf, hnf, h_f)
            c_f = jnp.where(mf, cnf, c_f)
            h_b = jnp.where(mb, hnb, h_b)
            c_b = jnp.where(mb, cnb, c_b)
            return h_f, c_f, h_b, c_b

        zeros = jnp.zeros((B, H), jnp.float32)
        h_f, c_f, h_b, c_b = jax.lax.fori_loop(
            0, T, body, (zeros, zeros, zeros, zeros), unroll=True)

        # ---- finalize: tanh(Linear(concat(h_fwd, h_bwd))) ----
        out = (jnp.dot(h_f, wout_ref[0], preferred_element_type=jnp.float32)
               + jnp.dot(h_b, wout_ref[1], preferred_element_type=jnp.float32)
               + bout_ref[...])
        out_ref[...] = jnp.tanh(out).astype(out_ref.dtype)

    return kernel


def run_bilstm_pallas(x_tm, lens, p):
    """x_tm: (T, B, E) f32 embedded chars (B multiple of 8), lens: (B, 1) i32.
    Returns (B, out_size) f32."""
    T, B, E = x_tm.shape
    H = p["whh_f"].shape[0]
    G = 4 * H
    O = p["wout"].shape[-1]
    O_pad = ((O + 127) // 128) * 128          # lane-dense output slab

    wout_p = jnp.pad(p["wout"], ((0, 0), (0, 0), (0, O_pad - O)))
    bout_p = jnp.pad(p["bout"], ((0, 0), (0, O_pad - O)))

    def full(shape):
        return pl.BlockSpec(shape, lambda i, _s=shape: (0,) * len(_s))

    in_specs = [
        full((T, B, E)),          # embedded chars (read once, both directions)
        full((B, 1)),             # word lengths
        full((E, G)), full((H, G)), full((1, G)),   # fwd: W_ih, W_hh, bias
        full((E, G)), full((H, G)), full((1, G)),   # bwd: W_ih, W_hh, bias
        full((2, H, O_pad)),      # Linear weight (split for fwd/bwd halves)
        full((1, O_pad)),         # Linear bias
    ]

    out = pl.pallas_call(
        make_bilstm_kernel(T, B, E, H),
        out_shape=jax.ShapeDtypeStruct((B, O_pad), jnp.float32),
        grid_spec=pltpu.PrefetchScalarGridSpec(
            num_scalar_prefetch=0,
            grid=(1,),                               # time loop is in-kernel
            in_specs=in_specs,
            out_specs=full((B, O_pad)),
            scratch_shapes=[pltpu.VMEM((T, B, G), jnp.float32),   # fwd pre-gates
                            pltpu.VMEM((T, B, G), jnp.float32)],  # bwd pre-gates
        ),
        compiler_params=pltpu.CompilerParams(
            dimension_semantics=("arbitrary",)),
    )(x_tm, lens,
      p["wih_f"], p["whh_f"], p["b_f"],
      p["wih_b"], p["whh_b"], p["b_b"],
      wout_p, bout_p)
    return out[:, :O]


# ----------------------------------------------------------------------------
# Parameter init (deterministic, synthetic — mirrors nn.Module shapes, gates
# stored fused as (.., 4H) in PyTorch i,f,g,o order; b = bias_ih + bias_hh)
# ----------------------------------------------------------------------------
def init_params(key, vocab, emb_size, hidden, out_size):
    ks = jax.random.split(key, 11)

    def u(k, shape, s):
        return jax.random.uniform(k, shape, jnp.float32, minval=-s, maxval=s)

    s_lstm = 1.0 / np.sqrt(hidden)
    s_lin = 1.0 / np.sqrt(2 * hidden)
    G = 4 * hidden
    return {
        "emb":   u(ks[0], (vocab, emb_size), 0.1),   # emb.weight.uniform_(-.1,.1)
        "wih_f": u(ks[1], (emb_size, G), s_lstm),
        "whh_f": u(ks[2], (hidden, G), s_lstm),
        "b_f":   u(ks[3], (1, G), s_lstm) + u(ks[4], (1, G), s_lstm),
        "wih_b": u(ks[5], (emb_size, G), s_lstm),
        "whh_b": u(ks[6], (hidden, G), s_lstm),
        "b_b":   u(ks[7], (1, G), s_lstm) + u(ks[8], (1, G), s_lstm),
        "wout":  u(ks[9], (2, hidden, out_size), s_lin),
        "bout":  u(ks[10], (1, out_size), s_lin),
    }


# ----------------------------------------------------------------------------
# Forward pass (glue + kernel)
# ----------------------------------------------------------------------------
def multibatch_charnet_forward(minibatch, params):
    """minibatch: list of sentences; sentence = list of words; word = char ids."""
    out_size = params["wout"].shape[-1]
    sent_lens = [len(s) for s in minibatch]
    words = [w for s in minibatch for w in s]
    B = len(words)
    B_pad = max(8, ((B + 7) // 8) * 8)                 # sublane-align the word batch

    word_lens = np.zeros((B_pad,), dtype=np.int32)
    word_lens[:B] = [len(w) for w in words]
    T = int(word_lens.max())

    padded = np.zeros((B_pad, T), dtype=np.int32)      # pad_token = 0
    for i, w in enumerate(words):
        padded[i, :len(w)] = np.asarray(w, dtype=np.int32)

    # char embedding lookup (glue)
    x_bte = jnp.take(params["emb"], jnp.asarray(padded), axis=0)   # (B_pad, T, E)
    x_tm = jnp.transpose(x_bte, (1, 0, 2))                         # (T, B_pad, E)
    lens = jnp.asarray(word_lens).reshape(B_pad, 1)

    word_out = run_bilstm_pallas(x_tm, lens, params)[:B]           # (B, out_size)

    # split_and_pad: pad each sentence's word vectors to len(sentence_0)
    # (matches PyTorch original, which assumes the first sentence is longest)
    max_seq_len = sent_lens[0]
    assert max_seq_len == max(sent_lens), \
        "split_and_pad assumes the first sentence is the longest"
    chunks, start = [], 0
    for L in sent_lens:
        chunk = word_out[start:start + L]
        if max_seq_len - L > 0:
            chunk = jnp.concatenate(
                [chunk, jnp.zeros((max_seq_len - L, out_size), jnp.float32)],
                axis=0)
        chunks.append(chunk)
        start += L
    final = jnp.stack(chunks, axis=0)          # (num_sents, max_seq_len, out)
    return word_out, final


# ----------------------------------------------------------------------------
# Pure-JAX reference (for sanity check of the kernel hot path)
# ----------------------------------------------------------------------------
def ref_word_out(x_bte, lens, p):
    B, T, E = x_bte.shape
    H = p["whh_f"].shape[0]
    HI = jax.lax.Precision.HIGHEST

    def cell(x, h, c, wih, whh, b):
        gates = (jnp.dot(x, wih, precision=HI)
                 + jnp.dot(h, whh, precision=HI) + b)
        i = jax.nn.sigmoid(gates[:, :H])
        f = jax.nn.sigmoid(gates[:, H:2 * H])
        g = jnp.tanh(gates[:, 2 * H:3 * H])
        o = jax.nn.sigmoid(gates[:, 3 * H:])
        c2 = f * c + i * g
        return o * jnp.tanh(c2), c2

    hf = jnp.zeros((B, H)); cf = jnp.zeros((B, H))
    hb = jnp.zeros((B, H)); cb = jnp.zeros((B, H))
    for t in range(T):
        hn, cn = cell(x_bte[:, t], hf, cf, p["wih_f"], p["whh_f"], p["b_f"])
        m = t < lens
        hf = jnp.where(m, hn, hf); cf = jnp.where(m, cn, cf)
        tb = T - 1 - t
        hn, cn = cell(x_bte[:, tb], hb, cb, p["wih_b"], p["whh_b"], p["b_b"])
        m = tb < lens
        hb = jnp.where(m, hn, hb); cb = jnp.where(m, cn, cb)
    return jnp.tanh(jnp.dot(hf, p["wout"][0], precision=HI)
                    + jnp.dot(hb, p["wout"][1], precision=HI) + p["bout"])


if __name__ == "__main__":
    CHAR_VOCAB = 30
    EMB_SIZE, HIDDEN, OUT_SIZE = 8, 16, 8

    key = jax.random.PRNGKey(0)
    k_par, k_data = jax.random.split(key)
    params = init_params(k_par, CHAR_VOCAB, EMB_SIZE, HIDDEN, OUT_SIZE)

    # minibatch: 2 sentences (first is the longest, as split_and_pad assumes),
    # 5 + 3 = 8 words total, variable word (char) lengths.
    word_char_lens = [[4, 7, 3, 5, 2], [6, 3, 4]]
    total_chars = sum(sum(s) for s in word_char_lens)
    char_ids = np.asarray(jax.random.randint(k_data, (total_chars,), 1, CHAR_VOCAB))
    minibatch, c = [], 0
    for slens in word_char_lens:
        sent = []
        for L in slens:
            sent.append([int(x) for x in char_ids[c:c + L]])
            c += L
        minibatch.append(sent)

    word_out, final_out = multibatch_charnet_forward(minibatch, params)
    final_out = jax.block_until_ready(final_out)
    assert final_out.shape == (2, 5, OUT_SIZE), final_out.shape

    # sanity check against pure-JAX reference of the hot path
    words = [w for s in minibatch for w in s]
    B = len(words)
    word_lens = np.array([len(w) for w in words], dtype=np.int32)
    T = int(word_lens.max())
    padded = np.zeros((B, T), dtype=np.int32)
    for i, w in enumerate(words):
        padded[i, :len(w)] = np.asarray(w, dtype=np.int32)
    x_bte = jnp.take(params["emb"], jnp.asarray(padded), axis=0)
    ref = ref_word_out(x_bte, jnp.asarray(word_lens).reshape(B, 1), params)
    np.testing.assert_allclose(np.asarray(word_out), np.asarray(ref),
                               rtol=2e-3, atol=2e-3)

    print("KERNEL_OK")
</pallas_src>

<mosaic_0001>
module attributes {stable_mosaic.version = 11 : i64} {
  func.func @kernel(%arg0: i32, %arg1: memref<7x8x8xf32, #tpu.memory_space<vmem>>, %arg2: memref<8x1xi32, #tpu.memory_space<vmem>>, %arg3: memref<8x64xf32, #tpu.memory_space<vmem>>, %arg4: memref<16x64xf32, #tpu.memory_space<vmem>>, %arg5: memref<1x64xf32, #tpu.memory_space<vmem>>, %arg6: memref<8x64xf32, #tpu.memory_space<vmem>>, %arg7: memref<16x64xf32, #tpu.memory_space<vmem>>, %arg8: memref<1x64xf32, #tpu.memory_space<vmem>>, %arg9: memref<2x16x128xf32, #tpu.memory_space<vmem>>, %arg10: memref<1x128xf32, #tpu.memory_space<vmem>>, %arg11: memref<8x128xf32, #tpu.memory_space<vmem>>, %arg12: memref<7x8x64xf32, #tpu.memory_space<vmem>>, %arg13: memref<7x8x64xf32, #tpu.memory_space<vmem>>) attributes {dimension_semantics = [#tpu.dimension_semantics<arbitrary>], iteration_bounds = array<i64: 1>, scalar_prefetch = 0 : i64, scratch_operands = 2 : i64, tpu.core_type = #tpu.core_type<tc>, window_params = [{pipeline_mode = #tpu.pipeline_mode<synchronous>, transform_indices = @transform_0, window_bounds = array<i64: 7, 8, 8>}, {pipeline_mode = #tpu.pipeline_mode<synchronous>, transform_indices = @transform_1, window_bounds = array<i64: 8, 1>}, {pipeline_mode = #tpu.pipeline_mode<synchronous>, transform_indices = @transform_2, window_bounds = array<i64: 8, 64>}, {pipeline_mode = #tpu.pipeline_mode<synchronous>, transform_indices = @transform_3, window_bounds = array<i64: 16, 64>}, {pipeline_mode = #tpu.pipeline_mode<synchronous>, transform_indices = @transform_4, window_bounds = array<i64: 1, 64>}, {pipeline_mode = #tpu.pipeline_mode<synchronous>, transform_indices = @transform_5, window_bounds = array<i64: 8, 64>}, {pipeline_mode = #tpu.pipeline_mode<synchronous>, transform_indices = @transform_6, window_bounds = array<i64: 16, 64>}, {pipeline_mode = #tpu.pipeline_mode<synchronous>, transform_indices = @transform_7, window_bounds = array<i64: 1, 64>}, {pipeline_mode = #tpu.pipeline_mode<synchronous>, transform_indices = @transform_8, window_bounds = array<i64: 2, 16, 128>}, {pipeline_mode = #tpu.pipeline_mode<synchronous>, transform_indices = @transform_9, window_bounds = array<i64: 1, 128>}, {pipeline_mode = #tpu.pipeline_mode<synchronous>, transform_indices = @transform_10, window_bounds = array<i64: 8, 128>}]} {
    %c0 = arith.constant 0 : index
    %c0_0 = arith.constant 0 : index
    %c0_1 = arith.constant 0 : index
    %0 = vector.load %arg1[%c0, %c0_0, %c0_1] : memref<7x8x8xf32, #tpu.memory_space<vmem>>, vector<7x8x8xf32>
    %1 = vector.shape_cast %0 : vector<7x8x8xf32> to vector<56x8xf32>
    %c0_2 = arith.constant 0 : index
    %c0_3 = arith.constant 0 : index
    %2 = vector.load %arg3[%c0_2, %c0_3] : memref<8x64xf32, #tpu.memory_space<vmem>>, vector<8x64xf32>
    %cst = arith.constant dense<0.000000e+00> : vector<56x64xf32>
    %3 = tpu.matmul %1, %2, %cst {dimension_numbers = #tpu.dot_dimension_numbers<[1], [0], [0], [1], [0, 0, 1, 1], [], []>} : vector<56x8xf32>, vector<8x64xf32>, vector<56x64xf32> -> vector<56x64xf32>
    %c0_4 = arith.constant 0 : index
    %c0_5 = arith.constant 0 : index
    %4 = vector.load %arg5[%c0_4, %c0_5] : memref<1x64xf32, #tpu.memory_space<vmem>>, vector<1x64xf32>
    %5 = vector.broadcast %4 : vector<1x64xf32> to vector<56x64xf32>
    %6 = arith.addf %3, %5 : vector<56x64xf32>
    %7 = vector.shape_cast %6 : vector<56x64xf32> to vector<7x8x64xf32>
    %c0_6 = arith.constant 0 : index
    %c0_7 = arith.constant 0 : index
    %c0_8 = arith.constant 0 : index
    %8 = vector.load %arg12[%c0_6, %c0_7, %c0_8] : memref<7x8x64xf32, #tpu.memory_space<vmem>>, vector<7x8x64xf32>
    tpu.vector_store %arg12[%c0_6, %c0_7, %c0_8], %7 {strides = array<i32>} : memref<7x8x64xf32, #tpu.memory_space<vmem>>, vector<7x8x64xf32>,
    %c0_9 = arith.constant 0 : index
    %c0_10 = arith.constant 0 : index
    %9 = vector.load %arg6[%c0_9, %c0_10] : memref<8x64xf32, #tpu.memory_space<vmem>>, vector<8x64xf32>
    %cst_11 = arith.constant dense<0.000000e+00> : vector<56x64xf32>
    %10 = tpu.matmul %1, %9, %cst_11 {dimension_numbers = #tpu.dot_dimension_numbers<[1], [0], [0], [1], [0, 0, 1, 1], [], []>} : vector<56x8xf32>, vector<8x64xf32>, vector<56x64xf32> -> vector<56x64xf32>
    %c0_12 = arith.constant 0 : index
    %c0_13 = arith.constant 0 : index
    %11 = vector.load %arg8[%c0_12, %c0_13] : memref<1x64xf32, #tpu.memory_space<vmem>>, vector<1x64xf32>
    %12 = vector.broadcast %11 : vector<1x64xf32> to vector<56x64xf32>
    %13 = arith.addf %10, %12 : vector<56x64xf32>
    %14 = vector.shape_cast %13 : vector<56x64xf32> to vector<7x8x64xf32>
    %c0_14 = arith.constant 0 : index
    %c0_15 = arith.constant 0 : index
    %c0_16 = arith.constant 0 : index
    %15 = vector.load %arg13[%c0_14, %c0_15, %c0_16] : memref<7x8x64xf32, #tpu.memory_space<vmem>>, vector<7x8x64xf32>
    tpu.vector_store %arg13[%c0_14, %c0_15, %c0_16], %14 {strides = array<i32>} : memref<7x8x64xf32, #tpu.memory_space<vmem>>, vector<7x8x64xf32>,
    %c0_17 = arith.constant 0 : index
    %c0_18 = arith.constant 0 : index
    %16 = vector.load %arg2[%c0_17, %c0_18] : memref<8x1xi32, #tpu.memory_space<vmem>>, vector<8x1xi32>
    %c0_19 = arith.constant 0 : index
    %c0_20 = arith.constant 0 : index
    %17 = vector.load %arg4[%c0_19, %c0_20] : memref<16x64xf32, #tpu.memory_space<vmem>>, vector<16x64xf32>
    %c0_21 = arith.constant 0 : index
    %c0_22 = arith.constant 0 : index
    %18 = vector.load %arg7[%c0_21, %c0_22] : memref<16x64xf32, #tpu.memory_space<vmem>>, vector<16x64xf32>
    %cst_23 = arith.constant 0.000000e+00 : f32
    %19 = vector.broadcast %cst_23 : f32 to vector<8x16xf32>
    %c0_i32 = arith.constant 0 : i32
    %c6_i32 = arith.constant 6 : i32
    %20 = arith.subi %c6_i32, %c0_i32 : i32
    %21 = arith.index_cast %c0_i32 : i32 to index
    %c0_24 = arith.constant 0 : index
    %c0_25 = arith.constant 0 : index
    %22 = vector.load %arg12[%21, %c0_24, %c0_25] : memref<7x8x64xf32, #tpu.memory_space<vmem>>, vector<1x8x64xf32>
    %23 = vector.shape_cast %22 : vector<1x8x64xf32> to vector<8x64xf32>
    %cst_26 = arith.constant dense<0.000000e+00> : vector<8x64xf32>
    %24 = tpu.matmul %19, %17, %cst_26 {dimension_numbers = #tpu.dot_dimension_numbers<[1], [0], [0], [1], [0, 0, 1, 1], [], []>} : vector<8x16xf32>, vector<16x64xf32>, vector<8x64xf32> -> vector<8x64xf32>
    %25 = arith.addf %23, %24 : vector<8x64xf32>
    %26 = vector.extract_strided_slice %25 {offsets = [0, 0], sizes = [8, 16], strides = [1, 1]} : vector<8x64xf32> to vector<8x16xf32>
    %27 = arith.negf %26 : vector<8x16xf32>
    %28 = math.exp %27 : vector<8x16xf32>
    %cst_27 = arith.constant 1.000000e+00 : f32
    %29 = vector.broadcast %cst_27 : f32 to vector<8x16xf32>
    %30 = arith.addf %29, %28 : vector<8x16xf32>
    %31 = arith.divf %29, %30 : vector<8x16xf32>
    %32 = vector.extract_strided_slice %25 {offsets = [0, 16], sizes = [8, 16], strides = [1, 1]} : vector<8x64xf32> to vector<8x16xf32>
    %33 = arith.negf %32 : vector<8x16xf32>
    %34 = math.exp %33 : vector<8x16xf32>
    %cst_28 = arith.constant 1.000000e+00 : f32
    %35 = vector.broadcast %cst_28 : f32 to vector<8x16xf32>
    %36 = arith.addf %35, %34 : vector<8x16xf32>
    %37 = arith.divf %35, %36 : vector<8x16xf32>
    %38 = vector.extract_strided_slice %25 {offsets = [0, 32], sizes = [8, 16], strides = [1, 1]} : vector<8x64xf32> to vector<8x16xf32>
    %39 = math.tanh %38 : vector<8x16xf32>
    %40 = vector.extract_strided_slice %25 {offsets = [0, 48], sizes = [8, 16], strides = [1, 1]} : vector<8x64xf32> to vector<8x16xf32>
    %41 = arith.negf %40 : vector<8x16xf32>
    %42 = math.exp %41 : vector<8x16xf32>
    %cst_29 = arith.constant 1.000000e+00 : f32
    %43 = vector.broadcast %cst_29 : f32 to vector<8x16xf32>
    %44 = arith.addf %43, %42 : vector<8x16xf32>
    %45 = arith.divf %43, %44 : vector<8x16xf32>
    %46 = arith.mulf %37, %19 : vector<8x16xf32>
    %47 = arith.mulf %31, %39 : vector<8x16xf32>
    %48 = arith.addf %46, %47 : vector<8x16xf32>
    %49 = math.tanh %48 : vector<8x16xf32>
    %50 = arith.mulf %45, %49 : vector<8x16xf32>
    %51 = arith.index_cast %20 : i32 to index
    %c0_30 = arith.constant 0 : index
    %c0_31 = arith.constant 0 : index
    %52 = vector.load %arg13[%51, %c0_30, %c0_31] : memref<7x8x64xf32, #tpu.memory_space<vmem>>, vector<1x8x64xf32>
    %53 = vector.shape_cast %52 : vector<1x8x64xf32> to vector<8x64xf32>
    %cst_32 = arith.constant dense<0.000000e+00> : vector<8x64xf32>
    %54 = tpu.matmul %19, %18, %cst_32 {dimension_numbers = #tpu.dot_dimension_numbers<[1], [0], [0], [1], [0, 0, 1, 1], [], []>} : vector<8x16xf32>, vector<16x64xf32>, vector<8x64xf32> -> vector<8x64xf32>
    %55 = arith.addf %53, %54 : vector<8x64xf32>
    %56 = vector.extract_strided_slice %55 {offsets = [0, 0], sizes = [8, 16], strides = [1, 1]} : vector<8x64xf32> to vector<8x16xf32>
    %57 = arith.negf %56 : vector<8x16xf32>
    %58 = math.exp %57 : vector<8x16xf32>
    %cst_33 = arith.constant 1.000000e+00 : f32
    %59 = vector.broadcast %cst_33 : f32 to vector<8x16xf32>
    %60 = arith.addf %59, %58 : vector<8x16xf32>
    %61 = arith.divf %59, %60 : vector<8x16xf32>
    %62 = vector.extract_strided_slice %55 {offsets = [0, 16], sizes = [8, 16], strides = [1, 1]} : vector<8x64xf32> to vector<8x16xf32>
    %63 = arith.negf %62 : vector<8x16xf32>
    %64 = math.exp %63 : vector<8x16xf32>
    %cst_34 = arith.constant 1.000000e+00 : f32
    %65 = vector.broadcast %cst_34 : f32 to vector<8x16xf32>
    %66 = arith.addf %65, %64 : vector<8x16xf32>
    %67 = arith.divf %65, %66 : vector<8x16xf32>
    %68 = vector.extract_strided_slice %55 {offsets = [0, 32], sizes = [8, 16], strides = [1, 1]} : vector<8x64xf32> to vector<8x16xf32>
    %69 = math.tanh %68 : vector<8x16xf32>
    %70 = vector.extract_strided_slice %55 {offsets = [0, 48], sizes = [8, 16], strides = [1, 1]} : vector<8x64xf32> to vector<8x16xf32>
    %71 = arith.negf %70 : vector<8x16xf32>
    %72 = math.exp %71 : vector<8x16xf32>
    %cst_35 = arith.constant 1.000000e+00 : f32
    %73 = vector.broadcast %cst_35 : f32 to vector<8x16xf32>
    %74 = arith.addf %73, %72 : vector<8x16xf32>
    %75 = arith.divf %73, %74 : vector<8x16xf32>
    %76 = arith.mulf %67, %19 : vector<8x16xf32>
    %77 = arith.mulf %61, %69 : vector<8x16xf32>
    %78 = arith.addf %76, %77 : vector<8x16xf32>
    %79 = math.tanh %78 : vector<8x16xf32>
    %80 = arith.mulf %75, %79 : vector<8x16xf32>
    %81 = vector.broadcast %c0_i32 : i32 to vector<8x1xi32>
    %82 = arith.cmpi slt, %81, %16 : vector<8x1xi32>
    %83 = vector.broadcast %20 : i32 to vector<8x1xi32>
    %84 = arith.cmpi slt, %83, %16 : vector<8x1xi32>
    %85 = vector.shape_cast %82 : vector<8x1xi1> to vector<8x1xi1>
    %86 = vector.broadcast %85 : vector<8x1xi1> to vector<8x16xi1>
    %87 = arith.select %86, %50, %19 : vector<8x16xi1>, vector<8x16xf32>
    %88 = vector.shape_cast %82 : vector<8x1xi1> to vector<8x1xi1>
    %89 = vector.broadcast %88 : vector<8x1xi1> to vector<8x16xi1>
    %90 = arith.select %89, %48, %19 : vector<8x16xi1>, vector<8x16xf32>
    %91 = vector.shape_cast %84 : vector<8x1xi1> to vector<8x1xi1>
    %92 = vector.broadcast %91 : vector<8x1xi1> to vector<8x16xi1>
    %93 = arith.select %92, %80, %19 : vector<8x16xi1>, vector<8x16xf32>
    %94 = vector.shape_cast %84 : vector<8x1xi1> to vector<8x1xi1>
    %95 = vector.broadcast %94 : vector<8x1xi1> to vector<8x16xi1>
    %96 = arith.select %95, %78, %19 : vector<8x16xi1>, vector<8x16xf32>
    %c1_i32 = arith.constant 1 : i32
    %c6_i32_36 = arith.constant 6 : i32
    %97 = arith.subi %c6_i32_36, %c1_i32 : i32
    %98 = arith.index_cast %c1_i32 : i32 to index
    %c0_37 = arith.constant 0 : index
    %c0_38 = arith.constant 0 : index
    %99 = vector.load %arg12[%98, %c0_37, %c0_38] : memref<7x8x64xf32, #tpu.memory_space<vmem>>, vector<1x8x64xf32>
    %100 = vector.shape_cast %99 : vector<1x8x64xf32> to vector<8x64xf32>
    %cst_39 = arith.constant dense<0.000000e+00> : vector<8x64xf32>
    %101 = tpu.matmul %87, %17, %cst_39 {dimension_numbers = #tpu.dot_dimension_numbers<[1], [0], [0], [1], [0, 0, 1, 1], [], []>} : vector<8x16xf32>, vector<16x64xf32>, vector<8x64xf32> -> vector<8x64xf32>
    %102 = arith.addf %100, %101 : vector<8x64xf32>
    %103 = vector.extract_strided_slice %102 {offsets = [0, 0], sizes = [8, 16], strides = [1, 1]} : vector<8x64xf32> to vector<8x16xf32>
    %104 = arith.negf %103 : vector<8x16xf32>
    %105 = math.exp %104 : vector<8x16xf32>
    %cst_40 = arith.constant 1.000000e+00 : f32
    %106 = vector.broadcast %cst_40 : f32 to vector<8x16xf32>
    %107 = arith.addf %106, %105 : vector<8x16xf32>
    %108 = arith.divf %106, %107 : vector<8x16xf32>
    %109 = vector.extract_strided_slice %102 {offsets = [0, 16], sizes = [8, 16], strides = [1, 1]} : vector<8x64xf32> to vector<8x16xf32>
    %110 = arith.negf %109 : vector<8x16xf32>
    %111 = math.exp %110 : vector<8x16xf32>
    %cst_41 = arith.constant 1.000000e+00 : f32
    %112 = vector.broadcast %cst_41 : f32 to vector<8x16xf32>
    %113 = arith.addf %112, %111 : vector<8x16xf32>
    %114 = arith.divf %112, %113 : vector<8x16xf32>
    %115 = vector.extract_strided_slice %102 {offsets = [0, 32], sizes = [8, 16], strides = [1, 1]} : vector<8x64xf32> to vector<8x16xf32>
    %116 = math.tanh %115 : vector<8x16xf32>
    %117 = vector.extract_strided_slice %102 {offsets = [0, 48], sizes = [8, 16], strides = [1, 1]} : vector<8x64xf32> to vector<8x16xf32>
    %118 = arith.negf %117 : vector<8x16xf32>
    %119 = math.exp %118 : vector<8x16xf32>
    %cst_42 = arith.constant 1.000000e+00 : f32
    %120 = vector.broadcast %cst_42 : f32 to vector<8x16xf32>
    %121 = arith.addf %120, %119 : vector<8x16xf32>
    %122 = arith.divf %120, %121 : vector<8x16xf32>
    %123 = arith.mulf %114, %90 : vector<8x16xf32>
    %124 = arith.mulf %108, %116 : vector<8x16xf32>
    %125 = arith.addf %123, %124 : vector<8x16xf32>
    %126 = math.tanh %125 : vector<8x16xf32>
    %127 = arith.mulf %122, %126 : vector<8x16xf32>
    %128 = arith.index_cast %97 : i32 to index
    %c0_43 = arith.constant 0 : index
    %c0_44 = arith.constant 0 : index
    %129 = vector.load %arg13[%128, %c0_43, %c0_44] : memref<7x8x64xf32, #tpu.memory_space<vmem>>, vector<1x8x64xf32>
    %130 = vector.shape_cast %129 : vector<1x8x64xf32> to vector<8x64xf32>
    %cst_45 = arith.constant dense<0.000000e+00> : vector<8x64xf32>
    %131 = tpu.matmul %93, %18, %cst_45 {dimension_numbers = #tpu.dot_dimension_numbers<[1], [0], [0], [1], [0, 0, 1, 1], [], []>} : vector<8x16xf32>, vector<16x64xf32>, vector<8x64xf32> -> vector<8x64xf32>
    %132 = arith.addf %130, %131 : vector<8x64xf32>
    %133 = vector.extract_strided_slice %132 {offsets = [0, 0], sizes = [8, 16], strides = [1, 1]} : vector<8x64xf32> to vector<8x16xf32>
    %134 = arith.negf %133 : vector<8x16xf32>
    %135 = math.exp %134 : vector<8x16xf32>
    %cst_46 = arith.constant 1.000000e+00 : f32
    %136 = vector.broadcast %cst_46 : f32 to vector<8x16xf32>
    %137 = arith.addf %136, %135 : vector<8x16xf32>
    %138 = arith.divf %136, %137 : vector<8x16xf32>
    %139 = vector.extract_strided_slice %132 {offsets = [0, 16], sizes = [8, 16], strides = [1, 1]} : vector<8x64xf32> to vector<8x16xf32>
    %140 = arith.negf %139 : vector<8x16xf32>
    %141 = math.exp %140 : vector<8x16xf32>
    %cst_47 = arith.constant 1.000000e+00 : f32
    %142 = vector.broadcast %cst_47 : f32 to vector<8x16xf32>
    %143 = arith.addf %142, %141 : vector<8x16xf32>
    %144 = arith.divf %142, %143 : vector<8x16xf32>
    %145 = vector.extract_strided_slice %132 {offsets = [0, 32], sizes = [8, 16], strides = [1, 1]} : vector<8x64xf32> to vector<8x16xf32>
    %146 = math.tanh %145 : vector<8x16xf32>
    %147 = vector.extract_strided_slice %132 {offsets = [0, 48], sizes = [8, 16], strides = [1, 1]} : vector<8x64xf32> to vector<8x16xf32>
    %148 = arith.negf %147 : vector<8x16xf32>
    %149 = math.exp %148 : vector<8x16xf32>
    %cst_48 = arith.constant 1.000000e+00 : f32
    %150 = vector.broadcast %cst_48 : f32 to vector<8x16xf32>
    %151 = arith.addf %150, %149 : vector<8x16xf32>
    %152 = arith.divf %150, %151 : vector<8x16xf32>
    %153 = arith.mulf %144, %96 : vector<8x16xf32>
    %154 = arith.mulf %138, %146 : vector<8x16xf32>
    %155 = arith.addf %153, %154 : vector<8x16xf32>
    %156 = math.tanh %155 : vector<8x16xf32>
    %157 = arith.mulf %152, %156 : vector<8x16xf32>
    %158 = vector.broadcast %c1_i32 : i32 to vector<8x1xi32>
    %159 = arith.cmpi slt, %158, %16 : vector<8x1xi32>
    %160 = vector.broadcast %97 : i32 to vector<8x1xi32>
    %161 = arith.cmpi slt, %160, %16 : vector<8x1xi32>
    %162 = vector.shape_cast %159 : vector<8x1xi1> to vector<8x1xi1>
    %163 = vector.broadcast %162 : vector<8x1xi1> to vector<8x16xi1>
    %164 = arith.select %163, %127, %87 : vector<8x16xi1>, vector<8x16xf32>
    %165 = vector.shape_cast %159 : vector<8x1xi1> to vector<8x1xi1>
    %166 = vector.broadcast %165 : vector<8x1xi1> to vector<8x16xi1>
    %167 = arith.select %166, %125, %90 : vector<8x16xi1>, vector<8x16xf32>
    %168 = vector.shape_cast %161 : vector<8x1xi1> to vector<8x1xi1>
    %169 = vector.broadcast %168 : vector<8x1xi1> to vector<8x16xi1>
    %170 = arith.select %169, %157, %93 : vector<8x16xi1>, vector<8x16xf32>
    %171 = vector.shape_cast %161 : vector<8x1xi1> to vector<8x1xi1>
    %172 = vector.broadcast %171 : vector<8x1xi1> to vector<8x16xi1>
    %173 = arith.select %172, %155, %96 : vector<8x16xi1>, vector<8x16xf32>
    %c2_i32 = arith.constant 2 : i32
    %c6_i32_49 = arith.constant 6 : i32
    %174 = arith.subi %c6_i32_49, %c2_i32 : i32
    %175 = arith.index_cast %c2_i32 : i32 to index
    %c0_50 = arith.constant 0 : index
    %c0_51 = arith.constant 0 : index
    %176 = vector.load %arg12[%175, %c0_50, %c0_51] : memref<7x8x64xf32, #tpu.memory_space<vmem>>, vector<1x8x64xf32>
    %177 = vector.shape_cast %176 : vector<1x8x64xf32> to vector<8x64xf32>
    %cst_52 = arith.constant dense<0.000000e+00> : vector<8x64xf32>
    %178 = tpu.matmul %164, %17, %cst_52 {dimension_numbers = #tpu.dot_dimension_numbers<[1], [0], [0], [1], [0, 0, 1, 1], [], []>} : vector<8x16xf32>, vector<16x64xf32>, vector<8x64xf32> -> vector<8x64xf32>
    %179 = arith.addf %177, %178 : vector<8x64xf32>
    %180 = vector.extract_strided_slice %179 {offsets = [0, 0], sizes = [8, 16], strides = [1, 1]} : vector<8x64xf32> to vector<8x16xf32>
    %181 = arith.negf %180 : vector<8x16xf32>
    %182 = math.exp %181 : vector<8x16xf32>
    %cst_53 = arith.constant 1.000000e+00 : f32
    %183 = vector.broadcast %cst_53 : f32 to vector<8x16xf32>
    %184 = arith.addf %183, %182 : vector<8x16xf32>
    %185 = arith.divf %183, %184 : vector<8x16xf32>
    %186 = vector.extract_strided_slice %179 {offsets = [0, 16], sizes = [8, 16], strides = [1, 1]} : vector<8x64xf32> to vector<8x16xf32>
    %187 = arith.negf %186 : vector<8x16xf32>
    %188 = math.exp %187 : vector<8x16xf32>
    %cst_54 = arith.constant 1.000000e+00 : f32
    %189 = vector.broadcast %cst_54 : f32 to vector<8x16xf32>
    %190 = arith.addf %189, %188 : vector<8x16xf32>
    %191 = arith.divf %189, %190 : vector<8x16xf32>
    %192 = vector.extract_strided_slice %179 {offsets = [0, 32], sizes = [8, 16], strides = [1, 1]} : vector<8x64xf32> to vector<8x16xf32>
    %193 = math.tanh %192 : vector<8x16xf32>
    %194 = vector.extract_strided_slice %179 {offsets = [0, 48], sizes = [8, 16], strides = [1, 1]} : vector<8x64xf32> to vector<8x16xf32>
    %195 = arith.negf %194 : vector<8x16xf32>
    %196 = math.exp %195 : vector<8x16xf32>
    %cst_55 = arith.constant 1.000000e+00 : f32
    %197 = vector.broadcast %cst_55 : f32 to vector<8x16xf32>
    %198 = arith.addf %197, %196 : vector<8x16xf32>
    %199 = arith.divf %197, %198 : vector<8x16xf32>
    %200 = arith.mulf %191, %167 : vector<8x16xf32>
    %201 = arith.mulf %185, %193 : vector<8x16xf32>
    %202 = arith.addf %200, %201 : vector<8x16xf32>
    %203 = math.tanh %202 : vector<8x16xf32>
    %204 = arith.mulf %199, %203 : vector<8x16xf32>
    %205 = arith.index_cast %174 : i32 to index
    %c0_56 = arith.constant 0 : index
    %c0_57 = arith.constant 0 : index
    %206 = vector.load %arg13[%205, %c0_56, %c0_57] : memref<7x8x64xf32, #tpu.memory_space<vmem>>, vector<1x8x64xf32>
    %207 = vector.shape_cast %206 : vector<1x8x64xf32> to vector<8x64xf32>
    %cst_58 = arith.constant dense<0.000000e+00> : vector<8x64xf32>
    %208 = tpu.matmul %170, %18, %cst_58 {dimension_numbers = #tpu.dot_dimension_numbers<[1], [0], [0], [1], [0, 0, 1, 1], [], []>} : vector<8x16xf32>, vector<16x64xf32>, vector<8x64xf32> -> vector<8x64xf32>
    %209 = arith.addf %207, %208 : vector<8x64xf32>
    %210 = vector.extract_strided_slice %209 {offsets = [0, 0], sizes = [8, 16], strides = [1, 1]} : vector<8x64xf32> to vector<8x16xf32>
    %211 = arith.negf %210 : vector<8x16xf32>
    %212 = math.exp %211 : vector<8x16xf32>
    %cst_59 = arith.constant 1.000000e+00 : f32
    %213 = vector.broadcast %cst_59 : f32 to vector<8x16xf32>
    %214 = arith.addf %213, %212 : vector<8x16xf32>
    %215 = arith.divf %213, %214 : vector<8x16xf32>
    %216 = vector.extract_strided_slice %209 {offsets = [0, 16], sizes = [8, 16], strides = [1, 1]} : vector<8x64xf32> to vector<8x16xf32>
    %217 = arith.negf %216 : vector<8x16xf32>
    %218 = math.exp %217 : vector<8x16xf32>
    %cst_60 = arith.constant 1.000000e+00 : f32
    %219 = vector.broadcast %cst_60 : f32 to vector<8x16xf32>
    %220 = arith.addf %219, %218 : vector<8x16xf32>
    %221 = arith.divf %219, %220 : vector<8x16xf32>
    %222 = vector.extract_strided_slice %209 {offsets = [0, 32], sizes = [8, 16], strides = [1, 1]} : vector<8x64xf32> to vector<8x16xf32>
    %223 = math.tanh %222 : vector<8x16xf32>
    %224 = vector.extract_strided_slice %209 {offsets = [0, 48], sizes = [8, 16], strides = [1, 1]} : vector<8x64xf32> to vector<8x16xf32>
    %225 = arith.negf %224 : vector<8x16xf32>
    %226 = math.exp %225 : vector<8x16xf32>
    %cst_61 = arith.constant 1.000000e+00 : f32
    %227 = vector.broadcast %cst_61 : f32 to vector<8x16xf32>
    %228 = arith.addf %227, %226 : vector<8x16xf32>
    %229 = arith.divf %227, %228 : vector<8x16xf32>
    %230 = arith.mulf %221, %173 : vector<8x16xf32>
    %231 = arith.mulf %215, %223 : vector<8x16xf32>
    %232 = arith.addf %230, %231 : vector<8x16xf32>
    %233 = math.tanh %232 : vector<8x16xf32>
    %234 = arith.mulf %229, %233 : vector<8x16xf32>
    %235 = vector.broadcast %c2_i32 : i32 to vector<8x1xi32>
    %236 = arith.cmpi slt, %235, %16 : vector<8x1xi32>
    %237 = vector.broadcast %174 : i32 to vector<8x1xi32>
    %238 = arith.cmpi slt, %237, %16 : vector<8x1xi32>
    %239 = vector.shape_cast %236 : vector<8x1xi1> to vector<8x1xi1>
    %240 = vector.broadcast %239 : vector<8x1xi1> to vector<8x16xi1>
    %241 = arith.select %240, %204, %164 : vector<8x16xi1>, vector<8x16xf32>
    %242 = vector.shape_cast %236 : vector<8x1xi1> to vector<8x1xi1>
    %243 = vector.broadcast %242 : vector<8x1xi1> to vector<8x16xi1>
    %244 = arith.select %243, %202, %167 : vector<8x16xi1>, vector<8x16xf32>
    %245 = vector.shape_cast %238 : vector<8x1xi1> to vector<8x1xi1>
    %246 = vector.broadcast %245 : vector<8x1xi1> to vector<8x16xi1>
    %247 = arith.select %246, %234, %170 : vector<8x16xi1>, vector<8x16xf32>
    %248 = vector.shape_cast %238 : vector<8x1xi1> to vector<8x1xi1>
    %249 = vector.broadcast %248 : vector<8x1xi1> to vector<8x16xi1>
    %250 = arith.select %249, %232, %173 : vector<8x16xi1>, vector<8x16xf32>
    %c3_i32 = arith.constant 3 : i32
    %c6_i32_62 = arith.constant 6 : i32
    %251 = arith.subi %c6_i32_62, %c3_i32 : i32
    %252 = arith.index_cast %c3_i32 : i32 to index
    %c0_63 = arith.constant 0 : index
    %c0_64 = arith.constant 0 : index
    %253 = vector.load %arg12[%252, %c0_63, %c0_64] : memref<7x8x64xf32, #tpu.memory_space<vmem>>, vector<1x8x64xf32>
    %254 = vector.shape_cast %253 : vector<1x8x64xf32> to vector<8x64xf32>
    %cst_65 = arith.constant dense<0.000000e+00> : vector<8x64xf32>
    %255 = tpu.matmul %241, %17, %cst_65 {dimension_numbers = #tpu.dot_dimension_numbers<[1], [0], [0], [1], [0, 0, 1, 1], [], []>} : vector<8x16xf32>, vector<16x64xf32>, vector<8x64xf32> -> vector<8x64xf32>
    %256 = arith.addf %254, %255 : vector<8x64xf32>
    %257 = vector.extract_strided_slice %256 {offsets = [0, 0], sizes = [8, 16], strides = [1, 1]} : vector<8x64xf32> to vector<8x16xf32>
    %258 = arith.negf %257 : vector<8x16xf32>
    %259 = math.exp %258 : vector<8x16xf32>
    %cst_66 = arith.constant 1.000000e+00 : f32
    %260 = vector.broadcast %cst_66 : f32 to vector<8x16xf32>
    %261 = arith.addf %260, %259 : vector<8x16xf32>
    %262 = arith.divf %260, %261 : vector<8x16xf32>
    %263 = vector.extract_strided_slice %256 {offsets = [0, 16], sizes = [8, 16], strides = [1, 1]} : vector<8x64xf32> to vector<8x16xf32>
    %264 = arith.negf %263 : vector<8x16xf32>
    %265 = math.exp %264 : vector<8x16xf32>
    %cst_67 = arith.constant 1.000000e+00 : f32
    %266 = vector.broadcast %cst_67 : f32 to vector<8x16xf32>
    %267 = arith.addf %266, %265 : vector<8x16xf32>
    %268 = arith.divf %266, %267 : vector<8x16xf32>
    %269 = vector.extract_strided_slice %256 {offsets = [0, 32], sizes = [8, 16], strides = [1, 1]} : vector<8x64xf32> to vector<8x16xf32>
    %270 = math.tanh %269 : vector<8x16xf32>
    %271 = vector.extract_strided_slice %256 {offsets = [0, 48], sizes = [8, 16], strides = [1, 1]} : vector<8x64xf32> to vector<8x16xf32>
    %272 = arith.negf %271 : vector<8x16xf32>
    %273 = math.exp %272 : vector<8x16xf32>
    %cst_68 = arith.constant 1.000000e+00 : f32
    %274 = vector.broadcast %cst_68 : f32 to vector<8x16xf32>
    %275 = arith.addf %274, %273 : vector<8x16xf32>
    %276 = arith.divf %274, %275 : vector<8x16xf32>
    %277 = arith.mulf %268, %244 : vector<8x16xf32>
    %278 = arith.mulf %262, %270 : vector<8x16xf32>
    %279 = arith.addf %277, %278 : vector<8x16xf32>
    %280 = math.tanh %279 : vector<8x16xf32>
    %281 = arith.mulf %276, %280 : vector<8x16xf32>
    %282 = arith.index_cast %251 : i32 to index
    %c0_69 = arith.constant 0 : index
    %c0_70 = arith.constant 0 : index
    %283 = vector.load %arg13[%282, %c0_69, %c0_70] : memref<7x8x64xf32, #tpu.memory_space<vmem>>, vector<1x8x64xf32>
    %284 = vector.shape_cast %283 : vector<1x8x64xf32> to vector<8x64xf32>
    %cst_71 = arith.constant dense<0.000000e+00> : vector<8x64xf32>
    %285 = tpu.matmul %247, %18, %cst_71 {dimension_numbers = #tpu.dot_dimension_numbers<[1], [0], [0], [1], [0, 0, 1, 1], [], []>} : vector<8x16xf32>, vector<16x64xf32>, vector<8x64xf32> -> vector<8x64xf32>
    %286 = arith.addf %284, %285 : vector<8x64xf32>
    %287 = vector.extract_strided_slice %286 {offsets = [0, 0], sizes = [8, 16], strides = [1, 1]} : vector<8x64xf32> to vector<8x16xf32>
    %288 = arith.negf %287 : vector<8x16xf32>
    %289 = math.exp %288 : vector<8x16xf32>
    %cst_72 = arith.constant 1.000000e+00 : f32
    %290 = vector.broadcast %cst_72 : f32 to vector<8x16xf32>
    %291 = arith.addf %290, %289 : vector<8x16xf32>
    %292 = arith.divf %290, %291 : vector<8x16xf32>
    %293 = vector.extract_strided_slice %286 {offsets = [0, 16], sizes = [8, 16], strides = [1, 1]} : vector<8x64xf32> to vector<8x16xf32>
    %294 = arith.negf %293 : vector<8x16xf32>
    %295 = math.exp %294 : vector<8x16xf32>
    %cst_73 = arith.constant 1.000000e+00 : f32
    %296 = vector.broadcast %cst_73 : f32 to vector<8x16xf32>
    %297 = arith.addf %296, %295 : vector<8x16xf32>
    %298 = arith.divf %296, %297 : vector<8x16xf32>
    %299 = vector.extract_strided_slice %286 {offsets = [0, 32], sizes = [8, 16], strides = [1, 1]} : vector<8x64xf32> to vector<8x16xf32>
    %300 = math.tanh %299 : vector<8x16xf32>
    %301 = vector.extract_strided_slice %286 {offsets = [0, 48], sizes = [8, 16], strides = [1, 1]} : vector<8x64xf32> to vector<8x16xf32>
    %302 = arith.negf %301 : vector<8x16xf32>
    %303 = math.exp %302 : vector<8x16xf32>
    %cst_74 = arith.constant 1.000000e+00 : f32
    %304 = vector.broadcast %cst_74 : f32 to vector<8x16xf32>
    %305 = arith.addf %304, %303 : vector<8x16xf32>
    %306 = arith.divf %304, %305 : vector<8x16xf32>
    %307 = arith.mulf %298, %250 : vector<8x16xf32>
    %308 = arith.mulf %292, %300 : vector<8x16xf32>
    %309 = arith.addf %307, %308 : vector<8x16xf32>
    %310 = math.tanh %309 : vector<8x16xf32>
    %311 = arith.mulf %306, %310 : vector<8x16xf32>
    %312 = vector.broadcast %c3_i32 : i32 to vector<8x1xi32>
    %313 = arith.cmpi slt, %312, %16 : vector<8x1xi32>
    %314 = vector.broadcast %251 : i32 to vector<8x1xi32>
    %315 = arith.cmpi slt, %314, %16 : vector<8x1xi32>
    %316 = vector.shape_cast %313 : vector<8x1xi1> to vector<8x1xi1>
    %317 = vector.broadcast %316 : vector<8x1xi1> to vector<8x16xi1>
    %318 = arith.select %317, %281, %241 : vector<8x16xi1>, vector<8x16xf32>
    %319 = vector.shape_cast %313 : vector<8x1xi1> to vector<8x1xi1>
    %320 = vector.broadcast %319 : vector<8x1xi1> to vector<8x16xi1>
    %321 = arith.select %320, %279, %244 : vector<8x16xi1>, vector<8x16xf32>
    %322 = vector.shape_cast %315 : vector<8x1xi1> to vector<8x1xi1>
    %323 = vector.broadcast %322 : vector<8x1xi1> to vector<8x16xi1>
    %324 = arith.select %323, %311, %247 : vector<8x16xi1>, vector<8x16xf32>
    %325 = vector.shape_cast %315 : vector<8x1xi1> to vector<8x1xi1>
    %326 = vector.broadcast %325 : vector<8x1xi1> to vector<8x16xi1>
    %327 = arith.select %326, %309, %250 : vector<8x16xi1>, vector<8x16xf32>
    %c4_i32 = arith.constant 4 : i32
    %c6_i32_75 = arith.constant 6 : i32
    %328 = arith.subi %c6_i32_75, %c4_i32 : i32
    %329 = arith.index_cast %c4_i32 : i32 to index
    %c0_76 = arith.constant 0 : index
    %c0_77 = arith.constant 0 : index
    %330 = vector.load %arg12[%329, %c0_76, %c0_77] : memref<7x8x64xf32, #tpu.memory_space<vmem>>, vector<1x8x64xf32>
    %331 = vector.shape_cast %330 : vector<1x8x64xf32> to vector<8x64xf32>
    %cst_78 = arith.constant dense<0.000000e+00> : vector<8x64xf32>
    %332 = tpu.matmul %318, %17, %cst_78 {dimension_numbers = #tpu.dot_dimension_numbers<[1], [0], [0], [1], [0, 0, 1, 1], [], []>} : vector<8x16xf32>, vector<16x64xf32>, vector<8x64xf32> -> vector<8x64xf32>
    %333 = arith.addf %331, %332 : vector<8x64xf32>
    %334 = vector.extract_strided_slice %333 {offsets = [0, 0], sizes = [8, 16], strides = [1, 1]} : vector<8x64xf32> to vector<8x16xf32>
    %335 = arith.negf %334 : vector<8x16xf32>
    %336 = math.exp %335 : vector<8x16xf32>
    %cst_79 = arith.constant 1.000000e+00 : f32
    %337 = vector.broadcast %cst_79 : f32 to vector<8x16xf32>
    %338 = arith.addf %337, %336 : vector<8x16xf32>
    %339 = arith.divf %337, %338 : vector<8x16xf32>
    %340 = vector.extract_strided_slice %333 {offsets = [0, 16], sizes = [8, 16], strides = [1, 1]} : vector<8x64xf32> to vector<8x16xf32>
    %341 = arith.negf %340 : vector<8x16xf32>
    %342 = math.exp %341 : vector<8x16xf32>
    %cst_80 = arith.constant 1.000000e+00 : f32
    %343 = vector.broadcast %cst_80 : f32 to vector<8x16xf32>
    %344 = arith.addf %343, %342 : vector<8x16xf32>
    %345 = arith.divf %343, %344 : vector<8x16xf32>
    %346 = vector.extract_strided_slice %333 {offsets = [0, 32], sizes = [8, 16], strides = [1, 1]} : vector<8x64xf32> to vector<8x16xf32>
    %347 = math.tanh %346 : vector<8x16xf32>
    %348 = vector.extract_strided_slice %333 {offsets = [0, 48], sizes = [8, 16], strides = [1, 1]} : vector<8x64xf32> to vector<8x16xf32>
    %349 = arith.negf %348 : vector<8x16xf32>
    %350 = math.exp %349 : vector<8x16xf32>
    %cst_81 = arith.constant 1.000000e+00 : f32
    %351 = vector.broadcast %cst_81 : f32 to vector<8x16xf32>
    %352 = arith.addf %351, %350 : vector<8x16xf32>
    %353 = arith.divf %351, %352 : vector<8x16xf32>
    %354 = arith.mulf %345, %321 : vector<8x16xf32>
    %355 = arith.mulf %339, %347 : vector<8x16xf32>
    %356 = arith.addf %354, %355 : vector<8x16xf32>
    %357 = math.tanh %356 : vector<8x16xf32>
    %358 = arith.mulf %353, %357 : vector<8x16xf32>
    %359 = arith.index_cast %328 : i32 to index
    %c0_82 = arith.constant 0 : index
    %c0_83 = arith.constant 0 : index
    %360 = vector.load %arg13[%359, %c0_82, %c0_83] : memref<7x8x64xf32, #tpu.memory_space<vmem>>, vector<1x8x64xf32>
    %361 = vector.shape_cast %360 : vector<1x8x64xf32> to vector<8x64xf32>
    %cst_84 = arith.constant dense<0.000000e+00> : vector<8x64xf32>
    %362 = tpu.matmul %324, %18, %cst_84 {dimension_numbers = #tpu.dot_dimension_numbers<[1], [0], [0], [1], [0, 0, 1, 1], [], []>} : vector<8x16xf32>, vector<16x64xf32>, vector<8x64xf32> -> vector<8x64xf32>
    %363 = arith.addf %361, %362 : vector<8x64xf32>
    %364 = vector.extract_strided_slice %363 {offsets = [0, 0], sizes = [8, 16], strides = [1, 1]} : vector<8x64xf32> to vector<8x16xf32>
    %365 = arith.negf %364 : vector<8x16xf32>
    %366 = math.exp %365 : vector<8x16xf32>
    %cst_85 = arith.constant 1.000000e+00 : f32
    %367 = vector.broadcast %cst_85 : f32 to vector<8x16xf32>
    %368 = arith.addf %367, %366 : vector<8x16xf32>
    %369 = arith.divf %367, %368 : vector<8x16xf32>
    %370 = vector.extract_strided_slice %363 {offsets = [0, 16], sizes = [8, 16], strides = [1, 1]} : vector<8x64xf32> to vector<8x16xf32>
    %371 = arith.negf %370 : vector<8x16xf32>
    %372 = math.exp %371 : vector<8x16xf32>
    %cst_86 = arith.constant 1.000000e+00 : f32
    %373 = vector.broadcast %cst_86 : f32 to vector<8x16xf32>
    %374 = arith.addf %373, %372 : vector<8x16xf32>
    %375 = arith.divf %373, %374 : vector<8x16xf32>
    %376 = vector.extract_strided_slice %363 {offsets = [0, 32], sizes = [8, 16], strides = [1, 1]} : vector<8x64xf32> to vector<8x16xf32>
    %377 = math.tanh %376 : vector<8x16xf32>
    %378 = vector.extract_strided_slice %363 {offsets = [0, 48], sizes = [8, 16], strides = [1, 1]} : vector<8x64xf32> to vector<8x16xf32>
    %379 = arith.negf %378 : vector<8x16xf32>
    %380 = math.exp %379 : vector<8x16xf32>
    %cst_87 = arith.constant 1.000000e+00 : f32
    %381 = vector.broadcast %cst_87 : f32 to vector<8x16xf32>
    %382 = arith.addf %381, %380 : vector<8x16xf32>
    %383 = arith.divf %381, %382 : vector<8x16xf32>
    %384 = arith.mulf %375, %327 : vector<8x16xf32>
    %385 = arith.mulf %369, %377 : vector<8x16xf32>
    %386 = arith.addf %384, %385 : vector<8x16xf32>
    %387 = math.tanh %386 : vector<8x16xf32>
    %388 = arith.mulf %383, %387 : vector<8x16xf32>
    %389 = vector.broadcast %c4_i32 : i32 to vector<8x1xi32>
    %390 = arith.cmpi slt, %389, %16 : vector<8x1xi32>
    %391 = vector.broadcast %328 : i32 to vector<8x1xi32>
    %392 = arith.cmpi slt, %391, %16 : vector<8x1xi32>
    %393 = vector.shape_cast %390 : vector<8x1xi1> to vector<8x1xi1>
    %394 = vector.broadcast %393 : vector<8x1xi1> to vector<8x16xi1>
    %395 = arith.select %394, %358, %318 : vector<8x16xi1>, vector<8x16xf32>
    %396 = vector.shape_cast %390 : vector<8x1xi1> to vector<8x1xi1>
    %397 = vector.broadcast %396 : vector<8x1xi1> to vector<8x16xi1>
    %398 = arith.select %397, %356, %321 : vector<8x16xi1>, vector<8x16xf32>
    %399 = vector.shape_cast %392 : vector<8x1xi1> to vector<8x1xi1>
    %400 = vector.broadcast %399 : vector<8x1xi1> to vector<8x16xi1>
    %401 = arith.select %400, %388, %324 : vector<8x16xi1>, vector<8x16xf32>
    %402 = vector.shape_cast %392 : vector<8x1xi1> to vector<8x1xi1>
    %403 = vector.broadcast %402 : vector<8x1xi1> to vector<8x16xi1>
    %404 = arith.select %403, %386, %327 : vector<8x16xi1>, vector<8x16xf32>
    %c5_i32 = arith.constant 5 : i32
    %c6_i32_88 = arith.constant 6 : i32
    %405 = arith.subi %c6_i32_88, %c5_i32 : i32
    %406 = arith.index_cast %c5_i32 : i32 to index
    %c0_89 = arith.constant 0 : index
    %c0_90 = arith.constant 0 : index
    %407 = vector.load %arg12[%406, %c0_89, %c0_90] : memref<7x8x64xf32, #tpu.memory_space<vmem>>, vector<1x8x64xf32>
    %408 = vector.shape_cast %407 : vector<1x8x64xf32> to vector<8x64xf32>
    %cst_91 = arith.constant dense<0.000000e+00> : vector<8x64xf32>
    %409 = tpu.matmul %395, %17, %cst_91 {dimension_numbers = #tpu.dot_dimension_numbers<[1], [0], [0], [1], [0, 0, 1, 1], [], []>} : vector<8x16xf32>, vector<16x64xf32>, vector<8x64xf32> -> vector<8x64xf32>
    %410 = arith.addf %408, %409 : vector<8x64xf32>
    %411 = vector.extract_strided_slice %410 {offsets = [0, 0], sizes = [8, 16], strides = [1, 1]} : vector<8x64xf32> to vector<8x16xf32>
    %412 = arith.negf %411 : vector<8x16xf32>
    %413 = math.exp %412 : vector<8x16xf32>
    %cst_92 = arith.constant 1.000000e+00 : f32
    %414 = vector.broadcast %cst_92 : f32 to vector<8x16xf32>
    %415 = arith.addf %414, %413 : vector<8x16xf32>
    %416 = arith.divf %414, %415 : vector<8x16xf32>
    %417 = vector.extract_strided_slice %410 {offsets = [0, 16], sizes = [8, 16], strides = [1, 1]} : vector<8x64xf32> to vector<8x16xf32>
    %418 = arith.negf %417 : vector<8x16xf32>
    %419 = math.exp %418 : vector<8x16xf32>
    %cst_93 = arith.constant 1.000000e+00 : f32
    %420 = vector.broadcast %cst_93 : f32 to vector<8x16xf32>
    %421 = arith.addf %420, %419 : vector<8x16xf32>
    %422 = arith.divf %420, %421 : vector<8x16xf32>
    %423 = vector.extract_strided_slice %410 {offsets = [0, 32], sizes = [8, 16], strides = [1, 1]} : vector<8x64xf32> to vector<8x16xf32>
    %424 = math.tanh %423 : vector<8x16xf32>
    %425 = vector.extract_strided_slice %410 {offsets = [0, 48], sizes = [8, 16], strides = [1, 1]} : vector<8x64xf32> to vector<8x16xf32>
    %426 = arith.negf %425 : vector<8x16xf32>
    %427 = math.exp %426 : vector<8x16xf32>
    %cst_94 = arith.constant 1.000000e+00 : f32
    %428 = vector.broadcast %cst_94 : f32 to vector<8x16xf32>
    %429 = arith.addf %428, %427 : vector<8x16xf32>
    %430 = arith.divf %428, %429 : vector<8x16xf32>
    %431 = arith.mulf %422, %398 : vector<8x16xf32>
    %432 = arith.mulf %416, %424 : vector<8x16xf32>
    %433 = arith.addf %431, %432 : vector<8x16xf32>
    %434 = math.tanh %433 : vector<8x16xf32>
    %435 = arith.mulf %430, %434 : vector<8x16xf32>
    %436 = arith.index_cast %405 : i32 to index
    %c0_95 = arith.constant 0 : index
    %c0_96 = arith.constant 0 : index
    %437 = vector.load %arg13[%436, %c0_95, %c0_96] : memref<7x8x64xf32, #tpu.memory_space<vmem>>, vector<1x8x64xf32>
    %438 = vector.shape_cast %437 : vector<1x8x64xf32> to vector<8x64xf32>
    %cst_97 = arith.constant dense<0.000000e+00> : vector<8x64xf32>
    %439 = tpu.matmul %401, %18, %cst_97 {dimension_numbers = #tpu.dot_dimension_numbers<[1], [0], [0], [1], [0, 0, 1, 1], [], []>} : vector<8x16xf32>, vector<16x64xf32>, vector<8x64xf32> -> vector<8x64xf32>
    %440 = arith.addf %438, %439 : vector<8x64xf32>
    %441 = vector.extract_strided_slice %440 {offsets = [0, 0], sizes = [8, 16], strides = [1, 1]} : vector<8x64xf32> to vector<8x16xf32>
    %442 = arith.negf %441 : vector<8x16xf32>
    %443 = math.exp %442 : vector<8x16xf32>
    %cst_98 = arith.constant 1.000000e+00 : f32
    %444 = vector.broadcast %cst_98 : f32 to vector<8x16xf32>
    %445 = arith.addf %444, %443 : vector<8x16xf32>
    %446 = arith.divf %444, %445 : vector<8x16xf32>
    %447 = vector.extract_strided_slice %440 {offsets = [0, 16], sizes = [8, 16], strides = [1, 1]} : vector<8x64xf32> to vector<8x16xf32>
    %448 = arith.negf %447 : vector<8x16xf32>
    %449 = math.exp %448 : vector<8x16xf32>
    %cst_99 = arith.constant 1.000000e+00 : f32
    %450 = vector.broadcast %cst_99 : f32 to vector<8x16xf32>
    %451 = arith.addf %450, %449 : vector<8x16xf32>
    %452 = arith.divf %450, %451 : vector<8x16xf32>
    %453 = vector.extract_strided_slice %440 {offsets = [0, 32], sizes = [8, 16], strides = [1, 1]} : vector<8x64xf32> to vector<8x16xf32>
    %454 = math.tanh %453 : vector<8x16xf32>
    %455 = vector.extract_strided_slice %440 {offsets = [0, 48], sizes = [8, 16], strides = [1, 1]} : vector<8x64xf32> to vector<8x16xf32>
    %456 = arith.negf %455 : vector<8x16xf32>
    %457 = math.exp %456 : vector<8x16xf32>
    %cst_100 = arith.constant 1.000000e+00 : f32
    %458 = vector.broadcast %cst_100 : f32 to vector<8x16xf32>
    %459 = arith.addf %458, %457 : vector<8x16xf32>
    %460 = arith.divf %458, %459 : vector<8x16xf32>
    %461 = arith.mulf %452, %404 : vector<8x16xf32>
    %462 = arith.mulf %446, %454 : vector<8x16xf32>
    %463 = arith.addf %461, %462 : vector<8x16xf32>
    %464 = math.tanh %463 : vector<8x16xf32>
    %465 = arith.mulf %460, %464 : vector<8x16xf32>
    %466 = vector.broadcast %c5_i32 : i32 to vector<8x1xi32>
    %467 = arith.cmpi slt, %466, %16 : vector<8x1xi32>
    %468 = vector.broadcast %405 : i32 to vector<8x1xi32>
    %469 = arith.cmpi slt, %468, %16 : vector<8x1xi32>
    %470 = vector.shape_cast %467 : vector<8x1xi1> to vector<8x1xi1>
    %471 = vector.broadcast %470 : vector<8x1xi1> to vector<8x16xi1>
    %472 = arith.select %471, %435, %395 : vector<8x16xi1>, vector<8x16xf32>
    %473 = vector.shape_cast %467 : vector<8x1xi1> to vector<8x1xi1>
    %474 = vector.broadcast %473 : vector<8x1xi1> to vector<8x16xi1>
    %475 = arith.select %474, %433, %398 : vector<8x16xi1>, vector<8x16xf32>
    %476 = vector.shape_cast %469 : vector<8x1xi1> to vector<8x1xi1>
    %477 = vector.broadcast %476 : vector<8x1xi1> to vector<8x16xi1>
    %478 = arith.select %477, %465, %401 : vector<8x16xi1>, vector<8x16xf32>
    %479 = vector.shape_cast %469 : vector<8x1xi1> to vector<8x1xi1>
    %480 = vector.broadcast %479 : vector<8x1xi1> to vector<8x16xi1>
    %481 = arith.select %480, %463, %404 : vector<8x16xi1>, vector<8x16xf32>
    %c6_i32_101 = arith.constant 6 : i32
    %c6_i32_102 = arith.constant 6 : i32
    %482 = arith.subi %c6_i32_102, %c6_i32_101 : i32
    %483 = arith.index_cast %c6_i32_101 : i32 to index
    %c0_103 = arith.constant 0 : index
    %c0_104 = arith.constant 0 : index
    %484 = vector.load %arg12[%483, %c0_103, %c0_104] : memref<7x8x64xf32, #tpu.memory_space<vmem>>, vector<1x8x64xf32>
    %485 = vector.shape_cast %484 : vector<1x8x64xf32> to vector<8x64xf32>
    %cst_105 = arith.constant dense<0.000000e+00> : vector<8x64xf32>
    %486 = tpu.matmul %472, %17, %cst_105 {dimension_numbers = #tpu.dot_dimension_numbers<[1], [0], [0], [1], [0, 0, 1, 1], [], []>} : vector<8x16xf32>, vector<16x64xf32>, vector<8x64xf32> -> vector<8x64xf32>
    %487 = arith.addf %485, %486 : vector<8x64xf32>
    %488 = vector.extract_strided_slice %487 {offsets = [0, 0], sizes = [8, 16], strides = [1, 1]} : vector<8x64xf32> to vector<8x16xf32>
    %489 = arith.negf %488 : vector<8x16xf32>
    %490 = math.exp %489 : vector<8x16xf32>
    %cst_106 = arith.constant 1.000000e+00 : f32
    %491 = vector.broadcast %cst_106 : f32 to vector<8x16xf32>
    %492 = arith.addf %491, %490 : vector<8x16xf32>
    %493 = arith.divf %491, %492 : vector<8x16xf32>
    %494 = vector.extract_strided_slice %487 {offsets = [0, 16], sizes = [8, 16], strides = [1, 1]} : vector<8x64xf32> to vector<8x16xf32>
    %495 = arith.negf %494 : vector<8x16xf32>
    %496 = math.exp %495 : vector<8x16xf32>
    %cst_107 = arith.constant 1.000000e+00 : f32
    %497 = vector.broadcast %cst_107 : f32 to vector<8x16xf32>
    %498 = arith.addf %497, %496 : vector<8x16xf32>
    %499 = arith.divf %497, %498 : vector<8x16xf32>
    %500 = vector.extract_strided_slice %487 {offsets = [0, 32], sizes = [8, 16], strides = [1, 1]} : vector<8x64xf32> to vector<8x16xf32>
    %501 = math.tanh %500 : vector<8x16xf32>
    %502 = vector.extract_strided_slice %487 {offsets = [0, 48], sizes = [8, 16], strides = [1, 1]} : vector<8x64xf32> to vector<8x16xf32>
    %503 = arith.negf %502 : vector<8x16xf32>
    %504 = math.exp %503 : vector<8x16xf32>
    %cst_108 = arith.constant 1.000000e+00 : f32
    %505 = vector.broadcast %cst_108 : f32 to vector<8x16xf32>
    %506 = arith.addf %505, %504 : vector<8x16xf32>
    %507 = arith.divf %505, %506 : vector<8x16xf32>
    %508 = arith.mulf %499, %475 : vector<8x16xf32>
    %509 = arith.mulf %493, %501 : vector<8x16xf32>
    %510 = arith.addf %508, %509 : vector<8x16xf32>
    %511 = math.tanh %510 : vector<8x16xf32>
    %512 = arith.mulf %507, %511 : vector<8x16xf32>
    %513 = arith.index_cast %482 : i32 to index
    %c0_109 = arith.constant 0 : index
    %c0_110 = arith.constant 0 : index
    %514 = vector.load %arg13[%513, %c0_109, %c0_110] : memref<7x8x64xf32, #tpu.memory_space<vmem>>, vector<1x8x64xf32>
    %515 = vector.shape_cast %514 : vector<1x8x64xf32> to vector<8x64xf32>
    %cst_111 = arith.constant dense<0.000000e+00> : vector<8x64xf32>
    %516 = tpu.matmul %478, %18, %cst_111 {dimension_numbers = #tpu.dot_dimension_numbers<[1], [0], [0], [1], [0, 0, 1, 1], [], []>} : vector<8x16xf32>, vector<16x64xf32>, vector<8x64xf32> -> vector<8x64xf32>
    %517 = arith.addf %515, %516 : vector<8x64xf32>
    %518 = vector.extract_strided_slice %517 {offsets = [0, 0], sizes = [8, 16], strides = [1, 1]} : vector<8x64xf32> to vector<8x16xf32>
    %519 = arith.negf %518 : vector<8x16xf32>
    %520 = math.exp %519 : vector<8x16xf32>
    %cst_112 = arith.constant 1.000000e+00 : f32
    %521 = vector.broadcast %cst_112 : f32 to vector<8x16xf32>
    %522 = arith.addf %521, %520 : vector<8x16xf32>
    %523 = arith.divf %521, %522 : vector<8x16xf32>
    %524 = vector.extract_strided_slice %517 {offsets = [0, 16], sizes = [8, 16], strides = [1, 1]} : vector<8x64xf32> to vector<8x16xf32>
    %525 = arith.negf %524 : vector<8x16xf32>
    %526 = math.exp %525 : vector<8x16xf32>
    %cst_113 = arith.constant 1.000000e+00 : f32
    %527 = vector.broadcast %cst_113 : f32 to vector<8x16xf32>
    %528 = arith.addf %527, %526 : vector<8x16xf32>
    %529 = arith.divf %527, %528 : vector<8x16xf32>
    %530 = vector.extract_strided_slice %517 {offsets = [0, 32], sizes = [8, 16], strides = [1, 1]} : vector<8x64xf32> to vector<8x16xf32>
    %531 = math.tanh %530 : vector<8x16xf32>
    %532 = vector.extract_strided_slice %517 {offsets = [0, 48], sizes = [8, 16], strides = [1, 1]} : vector<8x64xf32> to vector<8x16xf32>
    %533 = arith.negf %532 : vector<8x16xf32>
    %534 = math.exp %533 : vector<8x16xf32>
    %cst_114 = arith.constant 1.000000e+00 : f32
    %535 = vector.broadcast %cst_114 : f32 to vector<8x16xf32>
    %536 = arith.addf %535, %534 : vector<8x16xf32>
    %537 = arith.divf %535, %536 : vector<8x16xf32>
    %538 = arith.mulf %529, %481 : vector<8x16xf32>
    %539 = arith.mulf %523, %531 : vector<8x16xf32>
    %540 = arith.addf %538, %539 : vector<8x16xf32>
    %541 = math.tanh %540 : vector<8x16xf32>
    %542 = arith.mulf %537, %541 : vector<8x16xf32>
    %543 = vector.broadcast %c6_i32_101 : i32 to vector<8x1xi32>
    %544 = arith.cmpi slt, %543, %16 : vector<8x1xi32>
    %545 = vector.broadcast %482 : i32 to vector<8x1xi32>
    %546 = arith.cmpi slt, %545, %16 : vector<8x1xi32>
    %547 = vector.shape_cast %544 : vector<8x1xi1> to vector<8x1xi1>
    %548 = vector.broadcast %547 : vector<8x1xi1> to vector<8x16xi1>
    %549 = arith.select %548, %512, %472 : vector<8x16xi1>, vector<8x16xf32>
    %550 = vector.shape_cast %544 : vector<8x1xi1> to vector<8x1xi1>
    %551 = vector.broadcast %550 : vector<8x1xi1> to vector<8x16xi1>
    %552 = arith.select %551, %510, %475 : vector<8x16xi1>, vector<8x16xf32>
    %553 = vector.shape_cast %546 : vector<8x1xi1> to vector<8x1xi1>
    %554 = vector.broadcast %553 : vector<8x1xi1> to vector<8x16xi1>
    %555 = arith.select %554, %542, %478 : vector<8x16xi1>, vector<8x16xf32>
    %556 = vector.shape_cast %546 : vector<8x1xi1> to vector<8x1xi1>
    %557 = vector.broadcast %556 : vector<8x1xi1> to vector<8x16xi1>
    %558 = arith.select %557, %540, %481 : vector<8x16xi1>, vector<8x16xf32>
    %c7_i32 = arith.constant 7 : i32
    %c0_115 = arith.constant 0 : index
    %c0_116 = arith.constant 0 : index
    %c0_117 = arith.constant 0 : index
    %559 = vector.load %arg9[%c0_115, %c0_116, %c0_117] : memref<2x16x128xf32, #tpu.memory_space<vmem>>, vector<1x16x128xf32>
    %560 = vector.shape_cast %559 : vector<1x16x128xf32> to vector<16x128xf32>
    %cst_118 = arith.constant dense<0.000000e+00> : vector<8x128xf32>
    %561 = tpu.matmul %549, %560, %cst_118 {dimension_numbers = #tpu.dot_dimension_numbers<[1], [0], [0], [1], [0, 0, 1, 1], [], []>} : vector<8x16xf32>, vector<16x128xf32>, vector<8x128xf32> -> vector<8x128xf32>
    %c1 = arith.constant 1 : index
    %c0_119 = arith.constant 0 : index
    %c0_120 = arith.constant 0 : index
    %562 = vector.load %arg9[%c1, %c0_119, %c0_120] : memref<2x16x128xf32, #tpu.memory_space<vmem>>, vector<1x16x128xf32>
    %563 = vector.shape_cast %562 : vector<1x16x128xf32> to vector<16x128xf32>
    %cst_121 = arith.constant dense<0.000000e+00> : vector<8x128xf32>
    %564 = tpu.matmul %555, %563, %cst_121 {dimension_numbers = #tpu.dot_dimension_numbers<[1], [0], [0], [1], [0, 0, 1, 1], [], []>} : vector<8x16xf32>, vector<16x128xf32>, vector<8x128xf32> -> vector<8x128xf32>
    %565 = arith.addf %561, %564 : vector<8x128xf32>
    %c0_122 = arith.constant 0 : index
    %c0_123 = arith.constant 0 : index
    %566 = vector.load %arg10[%c0_122, %c0_123] : memref<1x128xf32, #tpu.memory_space<vmem>>, vector<1x128xf32>
    %567 = vector.broadcast %566 : vector<1x128xf32> to vector<8x128xf32>
    %568 = arith.addf %565, %567 : vector<8x128xf32>
    %569 = math.tanh %568 : vector<8x128xf32>
    %c0_124 = arith.constant 0 : index
    %c0_125 = arith.constant 0 : index
    %570 = vector.load %arg11[%c0_124, %c0_125] : memref<8x128xf32, #tpu.memory_space<vmem>>, vector<8x128xf32>
    tpu.vector_store %arg11[%c0_124, %c0_125], %569 {strides = array<i32>} : memref<8x128xf32, #tpu.memory_space<vmem>>, vector<8x128xf32>,
    return
  }
  func.func @transform_0(%arg0: i32) -> (i32, i32, i32) {
    %c0_i32 = arith.constant 0 : i32
    %c0_i32_0 = arith.constant 0 : i32
    %c0_i32_1 = arith.constant 0 : i32
    %c0_i32_2 = arith.constant 0 : i32
    return %c0_i32, %c0_i32_0, %c0_i32_1 : i32, i32, i32
  }
  func.func @transform_1(%arg0: i32) -> (i32, i32) {
    %c0_i32 = arith.constant 0 : i32
    %c0_i32_0 = arith.constant 0 : i32
    %c0_i32_1 = arith.constant 0 : i32
    return %c0_i32, %c0_i32_0 : i32, i32
  }
  func.func @transform_2(%arg0: i32) -> (i32, i32) {
    %c0_i32 = arith.constant 0 : i32
    %c0_i32_0 = arith.constant 0 : i32
    %c0_i32_1 = arith.constant 0 : i32
    return %c0_i32, %c0_i32_0 : i32, i32
  }
  func.func @transform_3(%arg0: i32) -> (i32, i32) {
    %c0_i32 = arith.constant 0 : i32
    %c0_i32_0 = arith.constant 0 : i32
    %c0_i32_1 = arith.constant 0 : i32
    return %c0_i32, %c0_i32_0 : i32, i32
  }
  func.func @transform_4(%arg0: i32) -> (i32, i32) {
    %c0_i32 = arith.constant 0 : i32
    %c0_i32_0 = arith.constant 0 : i32
    %c0_i32_1 = arith.constant 0 : i32
    return %c0_i32, %c0_i32_0 : i32, i32
  }
  func.func @transform_5(%arg0: i32) -> (i32, i32) {
    %c0_i32 = arith.constant 0 : i32
    %c0_i32_0 = arith.constant 0 : i32
    %c0_i32_1 = arith.constant 0 : i32
    return %c0_i32, %c0_i32_0 : i32, i32
  }
  func.func @transform_6(%arg0: i32) -> (i32, i32) {
    %c0_i32 = arith.constant 0 : i32
    %c0_i32_0 = arith.constant 0 : i32
    %c0_i32_1 = arith.constant 0 : i32
    return %c0_i32, %c0_i32_0 : i32, i32
  }
  func.func @transform_7(%arg0: i32) -> (i32, i32) {
    %c0_i32 = arith.constant 0 : i32
    %c0_i32_0 = arith.constant 0 : i32
    %c0_i32_1 = arith.constant 0 : i32
    return %c0_i32, %c0_i32_0 : i32, i32
  }
  func.func @transform_8(%arg0: i32) -> (i32, i32, i32) {
    %c0_i32 = arith.constant 0 : i32
    %c0_i32_0 = arith.constant 0 : i32
    %c0_i32_1 = arith.constant 0 : i32
    %c0_i32_2 = arith.constant 0 : i32
    return %c0_i32, %c0_i32_0, %c0_i32_1 : i32, i32, i32
  }
  func.func @transform_9(%arg0: i32) -> (i32, i32) {
    %c0_i32 = arith.constant 0 : i32
    %c0_i32_0 = arith.constant 0 : i32
    %c0_i32_1 = arith.constant 0 : i32
    return %c0_i32, %c0_i32_0 : i32, i32
  }
  func.func @transform_10(%arg0: i32) -> (i32, i32) {
    %c0_i32 = arith.constant 0 : i32
    %c0_i32_0 = arith.constant 0 : i32
    %c0_i32_1 = arith.constant 0 : i32
    return %c0_i32, %c0_i32_0 : i32, i32
  }
}

</mosaic_0001>

<llo_original>
// kernel: tpu_custom_call.1
$region0: #{tpu_custom_call.1}
  #allocation0 [shape = 'u32[]', space=smem, size = 0x4, offset = 0x4, fixed_abs, tag = 'smem constant byte address 0x4 - core index']
  #allocation1 [shape = 'u32[144,128]{1,0:T(1,128)}', space=vmem, size = 0x12000, scoped, tag = 'internal scratch']
  #allocation2 [shape = 'f32[7,8,64]{2,1,0:T(8,128)}', space=vmem, size = 0x7000, scoped, tag = 'scratch operand']
  #allocation3 [shape = 'f32[7,8,64]{2,1,0:T(8,128)}', space=vmem, size = 0x7000, scoped, tag = 'scratch operand']
  %s0 = inlined_call_operand.hbm [shape: f32[7,8,8], index: 0, kind: input, shape index: {}]
  %s1 = inlined_call_operand.vmem [shape: s32[8,1], index: 1, kind: input, shape index: {}]
  %s2 = inlined_call_operand.hbm [shape: f32[8,64], index: 2, kind: input, shape index: {}]
  %s3 = inlined_call_operand.hbm [shape: f32[16,64], index: 3, kind: input, shape index: {}]
  %s4 = inlined_call_operand.vmem [shape: f32[1,64], index: 4, kind: input, shape index: {}]
  %s5 = inlined_call_operand.hbm [shape: f32[8,64], index: 5, kind: input, shape index: {}]
  %s6 = inlined_call_operand.vmem [shape: f32[16,64], index: 6, kind: input, shape index: {}]
  %s7 = inlined_call_operand.vmem [shape: f32[1,64], index: 7, kind: input, shape index: {}]
  %s8 = inlined_call_operand.hbm [shape: f32[2,16,128], index: 8, kind: input, shape index: {}]
  %s9 = inlined_call_operand.vmem [shape: f32[1,128], index: 9, kind: input, shape index: {}]
  %s10 = inlined_call_operand.hbm [shape: f32[8,128], index: 10, kind: output, shape index: {}]
  %s11 = sld [smem:[#allocation0]]
  $region70: #{tpu_custom_call.1} parent=0
    _
  %s13 = ssub.s32 1, %s11
  %s14 = scalar_select 0, %s13, %s11
  $region1: #{tpu_custom_call.1} parent=0
    #allocation4 [shape = 'u8[28672]{0}', space=vmem, size = 0x7000, scoped, tag = 'input window, operand 0, single buffered']
    #allocation5 [shape = 's32[1]{0}', space=sflag, size = 0x4, scoped, tag = 'scoped memory for tpu_custom_call.1']
    #allocation6 [shape = 's32[1]{0}', space=sflag, size = 0x4, scoped, tag = 'scoped memory for tpu_custom_call.1']
    #allocation7 [shape = 'u8[4096]{0}', space=vmem, size = 0x1000, scoped, tag = 'input window, operand 2, single buffered']
    #allocation8 [shape = 's32[1]{0}', space=sflag, size = 0x4, scoped, tag = 'scoped memory for tpu_custom_call.1']
    #allocation9 [shape = 'u8[8192]{0}', space=vmem, size = 0x2000, scoped, tag = 'input window, operand 3, single buffered']
    #allocation10 [shape = 'u8[4096]{0}', space=vmem, size = 0x1000, scoped, tag = 'input window, operand 5, single buffered']
    #allocation11 [shape = 's32[1]{0}', space=sflag, size = 0x4, scoped, tag = 'scoped memory for tpu_custom_call.1']
    #allocation12 [shape = 'u8[16384]{0}', space=vmem, size = 0x4000, scoped, tag = 'input window, operand 8, single buffered']
    #allocation13 [shape = 'u8[4096]{0}', space=vmem, size = 0x1000, scoped, tag = 'output window, operand 0, single buffered']
    %15 = vsyncpa [#allocation5], 0
    %16 = vsyncpa [#allocation8], 0
    %17 = vsyncpa [#allocation11], 0
    %18 = vsyncpa [#allocation6], 0
    // Predicated region
    $region2: #{tpu_custom_call.1} parent=1 // pred_check
      _
    $region3: #{tpu_custom_call.1} parent=1 // pred_check_branch
      %20 = sbr.rel (0) target = $region5
    $region4: #{tpu_custom_call.1} parent=1 // pred_region
      %s22 = ssub.s32 896, 896
      %23 = vsyncadd [#allocation5], %s22
      %s24 = sshll.u32 [#allocation4], 4
      %s25 = int_to_ptr.vmem [resolvable:$true] %s24
      %30 = dma.hbm_to_vmem [thread:$0]  %s0, 896, %s25, [#allocation5], 128, 128, 8
    $region5: #{tpu_custom_call.1} parent=1 // pred_fallthru
      _
    // Predicated region
    $region6: #{tpu_custom_call.1} parent=1 // pred_check
      _
    $region7: #{tpu_custom_call.1} parent=1 // pred_check_branch
      %32 = sbr.rel (0) target = $region9
    $region8: #{tpu_custom_call.1} parent=1 // pred_region
      _
    $region9: #{tpu_custom_call.1} parent=1 // pred_fallthru
      _
    // Predicated region
    $region10: #{tpu_custom_call.1} parent=1 // pred_check
      _
    $region11: #{tpu_custom_call.1} parent=1 // pred_check_branch
      %34 = sbr.rel (0) target = $region13
    $region12: #{tpu_custom_call.1} parent=1 // pred_region
      %s36 = ssub.s32 128, 128
      %37 = vsyncadd [#allocation8], %s36
      %s39 = sshll.u32 [#allocation7], 4
      %s40 = int_to_ptr.vmem [resolvable:$true] %s39
      %42 = dma.hbm_to_vmem [thread:$0]  %s2, 128, %s40, [#allocation8]
    $region13: #{tpu_custom_call.1} parent=1 // pred_fallthru
      _
    // Predicated region
    $region14: #{tpu_custom_call.1} parent=1 // pred_check
      _
    $region15: #{tpu_custom_call.1} parent=1 // pred_check_branch
      %44 = sbr.rel (0) target = $region17
    $region16: #{tpu_custom_call.1} parent=1 // pred_region
      %s46 = ssub.s32 256, 256
      %47 = vsyncadd [#allocation8], %s46
      %s48 = sshll.u32 [#allocation9], 4
      %s49 = int_to_ptr.vmem [resolvable:$true] %s48
      %54 = dma.hbm_to_vmem [thread:$0]  %s3, 256, %s49, [#allocation8], 128, 128, 8
    $region17: #{tpu_custom_call.1} parent=1 // pred_fallthru
      _
    // Predicated region
    $region18: #{tpu_custom_call.1} parent=1 // pred_check
      _
    $region19: #{tpu_custom_call.1} parent=1 // pred_check_branch
      %56 = sbr.rel (0) target = $region21
    $region20: #{tpu_custom_call.1} parent=1 // pred_region
      _
    $region21: #{tpu_custom_call.1} parent=1 // pred_fallthru
      _
    // Predicated region
    $region22: #{tpu_custom_call.1} parent=1 // pred_check
      _
    $region23: #{tpu_custom_call.1} parent=1 // pred_check_branch
      %58 = sbr.rel (0) target = $region25
    $region24: #{tpu_custom_call.1} parent=1 // pred_region
      %s60 = ssub.s32 128, 128
      %61 = vsyncadd [#allocation11], %s60
      %s63 = sshll.u32 [#allocation10], 4
      %s64 = int_to_ptr.vmem [resolvable:$true] %s63
      %66 = dma.hbm_to_vmem [thread:$0]  %s5, 128, %s64, [#allocation11]
    $region25: #{tpu_custom_call.1} parent=1 // pred_fallthru
      _
    // Predicated region
    $region26: #{tpu_custom_call.1} parent=1 // pred_check
      _
    $region27: #{tpu_custom_call.1} parent=1 // pred_check_branch
      %68 = sbr.rel (0) target = $region29
    $region28: #{tpu_custom_call.1} parent=1 // pred_region
      _
    $region29: #{tpu_custom_call.1} parent=1 // pred_fallthru
      _
    // Predicated region
    $region30: #{tpu_custom_call.1} parent=1 // pred_check
      _
    $region31: #{tpu_custom_call.1} parent=1 // pred_check_branch
      %70 = sbr.rel (0) target = $region33
    $region32: #{tpu_custom_call.1} parent=1 // pred_region
      _
    $region33: #{tpu_custom_call.1} parent=1 // pred_fallthru
      _
    // Predicated region
    $region34: #{tpu_custom_call.1} parent=1 // pred_check
      _
    $region35: #{tpu_custom_call.1} parent=1 // pred_check_branch
      %72 = sbr.rel (0) target = $region37
    $region36: #{tpu_custom_call.1} parent=1 // pred_region
      %s74 = ssub.s32 512, 512
      %75 = vsyncadd [#allocation11], %s74
      %s76 = sshll.u32 [#allocation12], 4
      %s77 = int_to_ptr.vmem [resolvable:$true] %s76
      %82 = dma.hbm_to_vmem [thread:$0]  %s8, 512, %s77, [#allocation11], 128, 128, 8
    $region37: #{tpu_custom_call.1} parent=1 // pred_fallthru
      _
    // Predicated region
    $region38: #{tpu_custom_call.1} parent=1 // pred_check
      _
    $region39: #{tpu_custom_call.1} parent=1 // pred_check_branch
      %84 = sbr.rel (0) target = $region41
    $region40: #{tpu_custom_call.1} parent=1 // pred_region
      _
    $region41: #{tpu_custom_call.1} parent=1 // pred_fallthru
      _
    // Predicated region
    $region42: #{tpu_custom_call.1} parent=1 // pred_check
      _
    $region43: #{tpu_custom_call.1} parent=1 // pred_check_branch
      %86 = sbr.rel (0) target = $region45
    $region44: #{tpu_custom_call.1} parent=1 // pred_region
      %87 = dma.done [#allocation5], 896
    $region45: #{tpu_custom_call.1} parent=1 // pred_fallthru
      _
    // Predicated region
    $region46: #{tpu_custom_call.1} parent=1 // pred_check
      _
    $region47: #{tpu_custom_call.1} parent=1 // pred_check_branch
      %89 = sbr.rel (0) target = $region49
    $region48: #{tpu_custom_call.1} parent=1 // pred_region
      %90 = dma.done [#allocation8], 128
    $region49: #{tpu_custom_call.1} parent=1 // pred_fallthru
      _
    // Predicated region
    $region50: #{tpu_custom_call.1} parent=1 // pred_check
      _
    $region51: #{tpu_custom_call.1} parent=1 // pred_check_branch
      %92 = sbr.rel (0) target = $region53
    $region52: #{tpu_custom_call.1} parent=1 // pred_region
      %93 = dma.done [#allocation8], 256
    $region53: #{tpu_custom_call.1} parent=1 // pred_fallthru
      _
    // Predicated region
    $region54: #{tpu_custom_call.1} parent=1 // pred_check
      _
    $region55: #{tpu_custom_call.1} parent=1 // pred_check_branch
      %95 = sbr.rel (0) target = $region57
    $region56: #{tpu_custom_call.1} parent=1 // pred_region
      %96 = dma.done [#allocation11], 128
    $region57: #{tpu_custom_call.1} parent=1 // pred_fallthru
      _
    // Predicated region
    $region58: #{tpu_custom_call.1} parent=1 // pred_check
      _
    $region59: #{tpu_custom_call.1} parent=1 // pred_check_branch
      %98 = sbr.rel (0) target = $region61
    $region60: #{tpu_custom_call.1} parent=1 // pred_region
      %99 = dma.done [#allocation11], 512
    $region61: #{tpu_custom_call.1} parent=1 // pred_fallthru
      _
    %v100 = vld [vmem:[#allocation4] sm:$0xff]
    %v101 = vld [vmem:[#allocation4 + $0x8] sm:$0xff]
    %v102 = vld [vmem:[#allocation4 + $0x10] sm:$0xff]
    %v103 = vld [vmem:[#allocation4 + $0x18] sm:$0xff]
    %v104 = vld [vmem:[#allocation4 + $0x20] sm:$0xff]
    %v105 = vld [vmem:[#allocation4 + $0x28] sm:$0xff]
    %v106 = vld [vmem:[#allocation4 + $0x30] sm:$0xff]
    %v107 = vld [vmem:[#allocation7] sm:$0xff]
    %v108 = vld [vmem:[%s4] sm:$0x1]
    %v110 = vlaneseq
    %v111 = vshrl.u32 %v110, 7
    %v112 = vsub.s32 0, %v111
    %v113 = vrot.slane %v108, %v112
    %vm115 = vcmask 64512
    %v117 = vsel %vm115, %v100, 0
    %v120 = vsel %vm115, %v101, 0
    %v123 = vsel %vm115, %v102, 0
    %v126 = vsel %vm115, %v103, 0
    %v129 = vsel %vm115, %v104, 0
    %v132 = vsel %vm115, %v105, 0
    %v135 = vsel %vm115, %v106, 0
    %137 = vmatprep.subr.mxu0 0.0
    %138 = vmatpush1.msra.mxu0 0.0
    %139 = vmatprep.subr.mxu0 0.0
    %140 = vmatpush1.msra.mxu0 0.0
    %141 = vmatprep.subr.mxu0 0.0
    %142 = vmatpush1.msra.mxu0 0.0
    %143 = vmatprep.subr.mxu0 0.0
    %144 = vmatpush1.msra.mxu0 0.0
    %145 = vmatprep.subr.mxu0 0.0
    %146 = vmatpush1.msra.mxu0 0.0
    %147 = vmatprep.subr.mxu0 0.0
    %148 = vmatpush1.msra.mxu0 0.0
    %149 = vmatprep.subr.mxu0 0.0
    %150 = vmatpush1.msra.mxu0 0.0
    %151 = vmatprep.subr.mxu0 0.0
    %152 = vmatpush1.msra.mxu0 0.0
    %153 = vmatprep.subr.mxu0 0.0
    %154 = vmatpush1.msra.mxu0 0.0
    %155 = vmatprep.subr.mxu0 0.0
    %156 = vmatpush1.msra.mxu0 0.0
    %157 = vmatprep.subr.mxu0 0.0
    %158 = vmatpush1.msra.mxu0 0.0
    %159 = vmatprep.subr.mxu0 0.0
    %160 = vmatpush1.msra.mxu0 0.0
    %161 = vmatprep.subr.mxu0 0.0
    %162 = vmatpush1.msra.mxu0 0.0
    %163 = vmatprep.subr.mxu0 0.0
    %164 = vmatpush1.msra.mxu0 0.0
    %165 = vmatprep.subr.mxu0 0.0
    %166 = vmatpush1.msra.mxu0 0.0
    %167 = vmatprep.subr.mxu0 0.0
    %168 = vmatpush1.msra.mxu0 %v107
    %169 = vmatprep.subr.mxu0 0.0
    %170 = vmatpush2.msra.mxu0 0.0
    %171 = vmatprep.subr.mxu0 0.0
    %172 = vmatpush2.msra.mxu0 0.0
    %173 = vmatprep.subr.mxu0 0.0
    %174 = vmatpush2.msra.mxu0 0.0
    %175 = vmatprep.subr.mxu0 0.0
    %176 = vmatpush2.msra.mxu0 0.0
    %177 = vmatprep.subr.mxu0 0.0
    %178 = vmatpush2.msra.mxu0 0.0
    %179 = vmatprep.subr.mxu0 0.0
    %180 = vmatpush2.msra.mxu0 0.0
    %181 = vmatprep.subr.mxu0 0.0
    %182 = vmatpush2.msra.mxu0 0.0
    %183 = vmatprep.subr.mxu0 0.0
    %184 = vmatpush2.msra.mxu0 0.0
    %185 = vmatprep.subr.mxu0 0.0
    %186 = vmatpush2.msra.mxu0 0.0
    %187 = vmatprep.subr.mxu0 0.0
    %188 = vmatpush2.msra.mxu0 0.0
    %189 = vmatprep.subr.mxu0 0.0
    %190 = vmatpush2.msra.mxu0 0.0
    %191 = vmatprep.subr.mxu0 0.0
    %192 = vmatpush2.msra.mxu0 0.0
    %193 = vmatprep.subr.mxu0 0.0
    %194 = vmatpush2.msra.mxu0 0.0
    %195 = vmatprep.subr.mxu0 0.0
    %196 = vmatpush2.msra.mxu0 0.0
    %197 = vmatprep.subr.mxu0 0.0
    %198 = vmatpush2.msra.mxu0 0.0
    %199 = vmatprep.subr.mxu0 0.0
    %200 = vmatpush2.msra.mxu0 0.0
    %201 = vmatprep.mubr.f32.mxu0 0.0
    %202 = vmatmul.mubr.f32.gmra.mxu0 %v117
    %v203 = vpop.f32.mrf.mxu0
    %v204 = vadd.f32 %v113, %v203
    %v205 = vpop.f32.mrf.mxu0
    %206 = vmatprep.mubr.f32.mxu0 0.0
    %207 = vmatmul.mubr.f32.gmra.mxu0 %v120
    %v208 = vpop.f32.mrf.mxu0
    %v209 = vadd.f32 %v113, %v208
    %v210 = vpop.f32.mrf.mxu0
    %211 = vmatprep.mubr.f32.mxu0 0.0
    %212 = vmatmul.mubr.f32.gmra.mxu0 %v123
    %v213 = vpop.f32.mrf.mxu0
    %v214 = vadd.f32 %v113, %v213
    %v215 = vpop.f32.mrf.mxu0
    %216 = vmatprep.mubr.f32.mxu0 0.0
    %217 = vmatmul.mubr.f32.gmra.mxu0 %v126
    %v218 = vpop.f32.mrf.mxu0
    %v219 = vadd.f32 %v113, %v218
    %v220 = vpop.f32.mrf.mxu0
    %221 = vmatprep.mubr.f32.mxu0 0.0
    %222 = vmatmul.mubr.f32.gmra.mxu0 %v129
    %v223 = vpop.f32.mrf.mxu0
    %v224 = vadd.f32 %v113, %v223
    %v225 = vpop.f32.mrf.mxu0
    %226 = vmatprep.mubr.f32.mxu0 0.0
    %227 = vmatmul.mubr.f32.gmra.mxu0 %v132
    %v228 = vpop.f32.mrf.mxu0
    %v229 = vadd.f32 %v113, %v228
    %v230 = vpop.f32.mrf.mxu0
    %231 = vmatprep.mubr.f32.mxu0 0.0
    %232 = vmatmul.mubr.f32.gmra.mxu0 %v135
    %v233 = vpop.f32.mrf.mxu0
    %v234 = vadd.f32 %v113, %v233
    %v235 = vpop.f32.mrf.mxu0
    %236 = vdwg.mxu0
    %vm237 = vcmask 523264
    %238 = vst.msk [vmem:[#allocation2] sm:$0xff] %vm237, %v204
    %239 = vst.msk [vmem:[#allocation2 + $0x8] sm:$0xff] %vm237, %v209
    %240 = vst.msk [vmem:[#allocation2 + $0x10] sm:$0xff] %vm237, %v214
    %241 = vst.msk [vmem:[#allocation2 + $0x18] sm:$0xff] %vm237, %v219
    %242 = vst.msk [vmem:[#allocation2 + $0x20] sm:$0xff] %vm237, %v224
    %243 = vst.msk [vmem:[#allocation2 + $0x28] sm:$0xff] %vm237, %v229
    %244 = vst.msk [vmem:[#allocation2 + $0x30] sm:$0xff] %vm237, %v234
    %v245 = vld [vmem:[#allocation10] sm:$0xff]
    %v246 = vld [vmem:[%s7] sm:$0x1]
    %v248 = vlaneseq
    %v249 = vshrl.u32 %v248, 7
    %v250 = vsub.s32 0, %v249
    %v251 = vrot.slane %v246, %v250
    %253 = vmatprep.subr.mxu0 0.0
    %254 = vmatpush1.msra.mxu0 0.0
    %255 = vmatprep.subr.mxu0 0.0
    %256 = vmatpush1.msra.mxu0 0.0
    %257 = vmatprep.subr.mxu0 0.0
    %258 = vmatpush1.msra.mxu0 0.0
    %259 = vmatprep.subr.mxu0 0.0
    %260 = vmatpush1.msra.mxu0 0.0
    %261 = vmatprep.subr.mxu0 0.0
    %262 = vmatpush1.msra.mxu0 0.0
    %263 = vmatprep.subr.mxu0 0.0
    %264 = vmatpush1.msra.mxu0 0.0
    %265 = vmatprep.subr.mxu0 0.0
    %266 = vmatpush1.msra.mxu0 0.0
    %267 = vmatprep.subr.mxu0 0.0
    %268 = vmatpush1.msra.mxu0 0.0
    %269 = vmatprep.subr.mxu0 0.0
    %270 = vmatpush1.msra.mxu0 0.0
    %271 = vmatprep.subr.mxu0 0.0
    %272 = vmatpush1.msra.mxu0 0.0
    %273 = vmatprep.subr.mxu0 0.0
    %274 = vmatpush1.msra.mxu0 0.0
    %275 = vmatprep.subr.mxu0 0.0
    %276 = vmatpush1.msra.mxu0 0.0
    %277 = vmatprep.subr.mxu0 0.0
    %278 = vmatpush1.msra.mxu0 0.0
    %279 = vmatprep.subr.mxu0 0.0
    %280 = vmatpush1.msra.mxu0 0.0
    %281 = vmatprep.subr.mxu0 0.0
    %282 = vmatpush1.msra.mxu0 0.0
    %283 = vmatprep.subr.mxu0 0.0
    %284 = vmatpush1.msra.mxu0 %v245
    %285 = vmatprep.subr.mxu0 0.0
    %286 = vmatpush2.msra.mxu0 0.0
    %287 = vmatprep.subr.mxu0 0.0
    %288 = vmatpush2.msra.mxu0 0.0
    %289 = vmatprep.subr.mxu0 0.0
    %290 = vmatpush2.msra.mxu0 0.0
    %291 = vmatprep.subr.mxu0 0.0
    %292 = vmatpush2.msra.mxu0 0.0
    %293 = vmatprep.subr.mxu0 0.0
    %294 = vmatpush2.msra.mxu0 0.0
    %295 = vmatprep.subr.mxu0 0.0
    %296 = vmatpush2.msra.mxu0 0.0
    %297 = vmatprep.subr.mxu0 0.0
    %298 = vmatpush2.msra.mxu0 0.0
    %299 = vmatprep.subr.mxu0 0.0
    %300 = vmatpush2.msra.mxu0 0.0
    %301 = vmatprep.subr.mxu0 0.0
    %302 = vmatpush2.msra.mxu0 0.0
    %303 = vmatprep.subr.mxu0 0.0
    %304 = vmatpush2.msra.mxu0 0.0
    %305 = vmatprep.subr.mxu0 0.0
    %306 = vmatpush2.msra.mxu0 0.0
    %307 = vmatprep.subr.mxu0 0.0
    %308 = vmatpush2.msra.mxu0 0.0
    %309 = vmatprep.subr.mxu0 0.0
    %310 = vmatpush2.msra.mxu0 0.0
    %311 = vmatprep.subr.mxu0 0.0
    %312 = vmatpush2.msra.mxu0 0.0
    %313 = vmatprep.subr.mxu0 0.0
    %314 = vmatpush2.msra.mxu0 0.0
    %315 = vmatprep.subr.mxu0 0.0
    %316 = vmatpush2.msra.mxu0 0.0
    %317 = vmatprep.mubr.f32.mxu0 0.0
    %318 = vmatmul.mubr.f32.gmra.mxu0 %v117
    %v319 = vpop.f32.mrf.mxu0
    %v320 = vadd.f32 %v251, %v319
    %v321 = vpop.f32.mrf.mxu0
    %322 = vmatprep.mubr.f32.mxu0 0.0
    %323 = vmatmul.mubr.f32.gmra.mxu0 %v120
    %v324 = vpop.f32.mrf.mxu0
    %v325 = vadd.f32 %v251, %v324
    %v326 = vpop.f32.mrf.mxu0
    %327 = vmatprep.mubr.f32.mxu0 0.0
    %328 = vmatmul.mubr.f32.gmra.mxu0 %v123
    %v329 = vpop.f32.mrf.mxu0
    %v330 = vadd.f32 %v251, %v329
    %v331 = vpop.f32.mrf.mxu0
    %332 = vmatprep.mubr.f32.mxu0 0.0
    %333 = vmatmul.mubr.f32.gmra.mxu0 %v126
    %v334 = vpop.f32.mrf.mxu0
    %v335 = vadd.f32 %v251, %v334
    %v336 = vpop.f32.mrf.mxu0
    %337 = vmatprep.mubr.f32.mxu0 0.0
    %338 = vmatmul.mubr.f32.gmra.mxu0 %v129
    %v339 = vpop.f32.mrf.mxu0
    %v340 = vadd.f32 %v251, %v339
    %v341 = vpop.f32.mrf.mxu0
    %342 = vmatprep.mubr.f32.mxu0 0.0
    %343 = vmatmul.mubr.f32.gmra.mxu0 %v132
    %v344 = vpop.f32.mrf.mxu0
    %v345 = vadd.f32 %v251, %v344
    %v346 = vpop.f32.mrf.mxu0
    %347 = vmatprep.mubr.f32.mxu0 0.0
    %348 = vmatmul.mubr.f32.gmra.mxu0 %v135
    %v349 = vpop.f32.mrf.mxu0
    %v350 = vadd.f32 %v251, %v349
    %v351 = vpop.f32.mrf.mxu0
    %352 = vdwg.mxu0
    %353 = vst.msk [vmem:[#allocation3] sm:$0xff] %vm237, %v320
    %354 = vst.msk [vmem:[#allocation3 + $0x8] sm:$0xff] %vm237, %v325
    %355 = vst.msk [vmem:[#allocation3 + $0x10] sm:$0xff] %vm237, %v330
    %356 = vst.msk [vmem:[#allocation3 + $0x18] sm:$0xff] %vm237, %v335
    %357 = vst.msk [vmem:[#allocation3 + $0x20] sm:$0xff] %vm237, %v340
    %358 = vst.msk [vmem:[#allocation3 + $0x28] sm:$0xff] %vm237, %v345
    %359 = vst.msk [vmem:[#allocation3 + $0x30] sm:$0xff] %vm237, %v350
    %v360 = vld [vmem:[%s1] sm:$0xff]
    %v361 = vld [vmem:[#allocation9] sm:$0xff]
    %v362 = vld [vmem:[#allocation9 + $0x8] sm:$0xff]
    %v363 = vld [vmem:[%s6] sm:$0xff]
    %v364 = vld [vmem:[%s6 + $0x8] sm:$0xff]
    %v365 = vld [vmem:[#allocation2] sm:$0xff]
    %vm366 = vcmask 130048
    %v368 = vsel %vm366, 0.0, 0
    %370 = vmatprep.subr.mxu0 0.0
    %371 = vmatpush1.msra.mxu0 0.0
    %372 = vmatprep.subr.mxu0 0.0
    %373 = vmatpush1.msra.mxu0 0.0
    %374 = vmatprep.subr.mxu0 0.0
    %375 = vmatpush1.msra.mxu0 0.0
    %376 = vmatprep.subr.mxu0 0.0
    %377 = vmatpush1.msra.mxu0 0.0
    %378 = vmatprep.subr.mxu0 0.0
    %379 = vmatpush1.msra.mxu0 0.0
    %380 = vmatprep.subr.mxu0 0.0
    %381 = vmatpush1.msra.mxu0 0.0
    %382 = vmatprep.subr.mxu0 0.0
    %383 = vmatpush1.msra.mxu0 0.0
    %384 = vmatprep.subr.mxu0 0.0
    %385 = vmatpush1.msra.mxu0 0.0
    %386 = vmatprep.subr.mxu0 0.0
    %387 = vmatpush1.msra.mxu0 0.0
    %388 = vmatprep.subr.mxu0 0.0
    %389 = vmatpush1.msra.mxu0 0.0
    %390 = vmatprep.subr.mxu0 0.0
    %391 = vmatpush1.msra.mxu0 0.0
    %392 = vmatprep.subr.mxu0 0.0
    %393 = vmatpush1.msra.mxu0 0.0
    %394 = vmatprep.subr.mxu0 0.0
    %395 = vmatpush1.msra.mxu0 0.0
    %396 = vmatprep.subr.mxu0 0.0
    %397 = vmatpush1.msra.mxu0 0.0
    %398 = vmatprep.subr.mxu0 0.0
    %399 = vmatpush1.msra.mxu0 %v362
    %400 = vmatprep.subr.mxu0 0.0
    %401 = vmatpush1.msra.mxu0 %v361
    %402 = vmatprep.subr.mxu0 0.0
    %403 = vmatpush2.msra.mxu0 0.0
    %404 = vmatprep.subr.mxu0 0.0
    %405 = vmatpush2.msra.mxu0 0.0
    %406 = vmatprep.subr.mxu0 0.0
    %407 = vmatpush2.msra.mxu0 0.0
    %408 = vmatprep.subr.mxu0 0.0
    %409 = vmatpush2.msra.mxu0 0.0
    %410 = vmatprep.subr.mxu0 0.0
    %411 = vmatpush2.msra.mxu0 0.0
    %412 = vmatprep.subr.mxu0 0.0
    %413 = vmatpush2.msra.mxu0 0.0
    %414 = vmatprep.subr.mxu0 0.0
    %415 = vmatpush2.msra.mxu0 0.0
    %416 = vmatprep.subr.mxu0 0.0
    %417 = vmatpush2.msra.mxu0 0.0
    %418 = vmatprep.subr.mxu0 0.0
    %419 = vmatpush2.msra.mxu0 0.0
    %420 = vmatprep.subr.mxu0 0.0
    %421 = vmatpush2.msra.mxu0 0.0
    %422 = vmatprep.subr.mxu0 0.0
    %423 = vmatpush2.msra.mxu0 0.0
    %424 = vmatprep.subr.mxu0 0.0
    %425 = vmatpush2.msra.mxu0 0.0
    %426 = vmatprep.subr.mxu0 0.0
    %427 = vmatpush2.msra.mxu0 0.0
    %428 = vmatprep.subr.mxu0 0.0
    %429 = vmatpush2.msra.mxu0 0.0
    %430 = vmatprep.subr.mxu0 0.0
    %431 = vmatpush2.msra.mxu0 0.0
    %432 = vmatprep.subr.mxu0 0.0
    %433 = vmatpush2.msra.mxu0 0.0
    %434 = vmatprep.mubr.f32.mxu0 0.0
    %435 = vmatmul.mubr.f32.gmra.mxu0 %v368
    %v436 = vpop.f32.mrf.mxu0
    %v437 = vadd.f32 0.0, %v436
    %v438 = vpop.f32.mrf.mxu0
    %439 = vdwg.mxu0
    %v440 = vadd.f32 %v365, %v437
    %v441 = vxor.u32 %v440, 2147483648
    %v442 = vmul.f32 %v441, 1.442695
    %v443 = vpow.pop %v442
    %v444 = vadd.f32 %v443, 1.0
    %v445 = vrcp.pop %v444
    %v446 = vmul.f32 1.0, %v445
    %v447 = vtanh.pop %v440
    %v448 = vmul.f32 %v446, 0.0
    %450 = vrot.lane.b32.xlu0 %v447, 96
    %v451 = vpop.permute.xlu0 %450
    %v453 = vmul.f32 %v446, %v451
    %455 = vrot.lane.b32.xlu0 %v453, 16
    %v456 = vpop.permute.xlu0 %455
    %v458 = vadd.f32 %v448, %v456
    %v459 = vtanh.pop %v458
    %461 = vrot.lane.b32.xlu0 %v459, 32
    %v462 = vpop.permute.xlu0 %461
    %v464 = vmul.f32 %v446, %v462
    %s465 = scalar_lea.vmem [#allocation3], 48
    %v466 = vld [vmem:[%s465] sm:$0xff]
    %467 = vmatprep.subr.mxu0 0.0
    %468 = vmatpush1.msra.mxu0 0.0
    %469 = vmatprep.subr.mxu0 0.0
    %470 = vmatpush1.msra.mxu0 0.0
    %471 = vmatprep.subr.mxu0 0.0
    %472 = vmatpush1.msra.mxu0 0.0
    %473 = vmatprep.subr.mxu0 0.0
    %474 = vmatpush1.msra.mxu0 0.0
    %475 = vmatprep.subr.mxu0 0.0
    %476 = vmatpush1.msra.mxu0 0.0
    %477 = vmatprep.subr.mxu0 0.0
    %478 = vmatpush1.msra.mxu0 0.0
    %479 = vmatprep.subr.mxu0 0.0
    %480 = vmatpush1.msra.mxu0 0.0
    %481 = vmatprep.subr.mxu0 0.0
    %482 = vmatpush1.msra.mxu0 0.0
    %483 = vmatprep.subr.mxu0 0.0
    %484 = vmatpush1.msra.mxu0 0.0
    %485 = vmatprep.subr.mxu0 0.0
    %486 = vmatpush1.msra.mxu0 0.0
    %487 = vmatprep.subr.mxu0 0.0
    %488 = vmatpush1.msra.mxu0 0.0
    %489 = vmatprep.subr.mxu0 0.0
    %490 = vmatpush1.msra.mxu0 0.0
    %491 = vmatprep.subr.mxu0 0.0
    %492 = vmatpush1.msra.mxu0 0.0
    %493 = vmatprep.subr.mxu0 0.0
    %494 = vmatpush1.msra.mxu0 0.0
    %495 = vmatprep.subr.mxu0 0.0
    %496 = vmatpush1.msra.mxu0 %v364
    %497 = vmatprep.subr.mxu0 0.0
    %498 = vmatpush1.msra.mxu0 %v363
    %499 = vmatprep.subr.mxu0 0.0
    %500 = vmatpush2.msra.mxu0 0.0
    %501 = vmatprep.subr.mxu0 0.0
    %502 = vmatpush2.msra.mxu0 0.0
    %503 = vmatprep.subr.mxu0 0.0
    %504 = vmatpush2.msra.mxu0 0.0
    %505 = vmatprep.subr.mxu0 0.0
    %506 = vmatpush2.msra.mxu0 0.0
    %507 = vmatprep.subr.mxu0 0.0
    %508 = vmatpush2.msra.mxu0 0.0
    %509 = vmatprep.subr.mxu0 0.0
    %510 = vmatpush2.msra.mxu0 0.0
    %511 = vmatprep.subr.mxu0 0.0
    %512 = vmatpush2.msra.mxu0 0.0
    %513 = vmatprep.subr.mxu0 0.0
    %514 = vmatpush2.msra.mxu0 0.0
    %515 = vmatprep.subr.mxu0 0.0
    %516 = vmatpush2.msra.mxu0 0.0
    %517 = vmatprep.subr.mxu0 0.0
    %518 = vmatpush2.msra.mxu0 0.0
    %519 = vmatprep.subr.mxu0 0.0
    %520 = vmatpush2.msra.mxu0 0.0
    %521 = vmatprep.subr.mxu0 0.0
    %522 = vmatpush2.msra.mxu0 0.0
    %523 = vmatprep.subr.mxu0 0.0
    %524 = vmatpush2.msra.mxu0 0.0
    %525 = vmatprep.subr.mxu0 0.0
    %526 = vmatpush2.msra.mxu0 0.0
    %527 = vmatprep.subr.mxu0 0.0
    %528 = vmatpush2.msra.mxu0 0.0
    %529 = vmatprep.subr.mxu0 0.0
    %530 = vmatpush2.msra.mxu0 0.0
    %531 = vmatprep.mubr.f32.mxu0 0.0
    %532 = vmatmul.mubr.f32.gmra.mxu0 %v368
    %v533 = vpop.f32.mrf.mxu0
    %v534 = vadd.f32 0.0, %v533
    %v535 = vpop.f32.mrf.mxu0
    %536 = vdwg.mxu0
    %v537 = vadd.f32 %v466, %v534
    %v538 = vxor.u32 %v537, 2147483648
    %v539 = vmul.f32 %v538, 1.442695
    %v540 = vpow.pop %v539
    %v541 = vadd.f32 %v540, 1.0
    %v542 = vrcp.pop %v541
    %v543 = vmul.f32 1.0, %v542
    %v544 = vtanh.pop %v537
    %v545 = vmul.f32 %v543, 0.0
    %547 = vrot.lane.b32.xlu0 %v544, 96
    %v548 = vpop.permute.xlu0 %547
    %v550 = vmul.f32 %v543, %v548
    %552 = vrot.lane.b32.xlu0 %v550, 16
    %v553 = vpop.permute.xlu0 %552
    %v555 = vadd.f32 %v545, %v553
    %v556 = vtanh.pop %v555
    %558 = vrot.lane.b32.xlu0 %v556, 32
    %v559 = vpop.permute.xlu0 %558
    %v561 = vmul.f32 %v543, %v559
    %vm562 = vcmp.gt.s32.totalorder %v360, 0
    %vm563 = vcmp.gt.s32.totalorder %v360, 6
    %v564 = vsel %vm562, 1, 0
    %565 = vset.pattern.permute.xlu0 0
    %566 = vperm.xlu0 %565, %v564
    %v567 = vpop.permute.xlu0 %566
    %vm568 = vcmp.eq.s32.totalorder %v567, 1
    %v569 = vsel %vm568, %v464, 0.0
    %v570 = vsel %vm568, %v458, 0.0
    %v571 = vsel %vm563, 1, 0
    %572 = vset.pattern.permute.xlu0 0
    %573 = vperm.xlu0 %572, %v571
    %v574 = vpop.permute.xlu0 %573
    %vm575 = vcmp.eq.s32.totalorder %v574, 1
    %v576 = vsel %vm575, %v561, 0.0
    %v577 = vsel %vm575, %v555, 0.0
    %s578 = scalar_lea.vmem [#allocation2], 8
    %v579 = vld [vmem:[%s578] sm:$0xff]
    %581 = vrot.lane.b32.xlu0 %v569, 80
    %v582 = vpop.permute.xlu0 %581
    %v583 = vsel %vm366, %v582, 0
    %585 = vmatprep.subr.mxu0 0.0
    %586 = vmatpush1.msra.mxu0 0.0
    %587 = vmatprep.subr.mxu0 0.0
    %588 = vmatpush1.msra.mxu0 0.0
    %589 = vmatprep.subr.mxu0 0.0
    %590 = vmatpush1.msra.mxu0 0.0
    %591 = vmatprep.subr.mxu0 0.0
    %592 = vmatpush1.msra.mxu0 0.0
    %593 = vmatprep.subr.mxu0 0.0
    %594 = vmatpush1.msra.mxu0 0.0
    %595 = vmatprep.subr.mxu0 0.0
    %596 = vmatpush1.msra.mxu0 0.0
    %597 = vmatprep.subr.mxu0 0.0
    %598 = vmatpush1.msra.mxu0 0.0
    %599 = vmatprep.subr.mxu0 0.0
    %600 = vmatpush1.msra.mxu0 0.0
    %601 = vmatprep.subr.mxu0 0.0
    %602 = vmatpush1.msra.mxu0 0.0
    %603 = vmatprep.subr.mxu0 0.0
    %604 = vmatpush1.msra.mxu0 0.0
    %605 = vmatprep.subr.mxu0 0.0
    %606 = vmatpush1.msra.mxu0 0.0
    %607 = vmatprep.subr.mxu0 0.0
    %608 = vmatpush1.msra.mxu0 0.0
    %609 = vmatprep.subr.mxu0 0.0
    %610 = vmatpush1.msra.mxu0 0.0
    %611 = vmatprep.subr.mxu0 0.0
    %612 = vmatpush1.msra.mxu0 0.0
    %613 = vmatprep.subr.mxu0 0.0
    %614 = vmatpush1.msra.mxu0 %v362
    %615 = vmatprep.subr.mxu0 0.0
    %616 = vmatpush1.msra.mxu0 %v361
    %617 = vmatprep.subr.mxu0 0.0
    %618 = vmatpush2.msra.mxu0 0.0
    %619 = vmatprep.subr.mxu0 0.0
    %620 = vmatpush2.msra.mxu0 0.0
    %621 = vmatprep.subr.mxu0 0.0
    %622 = vmatpush2.msra.mxu0 0.0
    %623 = vmatprep.subr.mxu0 0.0
    %624 = vmatpush2.msra.mxu0 0.0
    %625 = vmatprep.subr.mxu0 0.0
    %626 = vmatpush2.msra.mxu0 0.0
    %627 = vmatprep.subr.mxu0 0.0
    %628 = vmatpush2.msra.mxu0 0.0
    %629 = vmatprep.subr.mxu0 0.0
    %630 = vmatpush2.msra.mxu0 0.0
    %631 = vmatprep.subr.mxu0 0.0
    %632 = vmatpush2.msra.mxu0 0.0
    %633 = vmatprep.subr.mxu0 0.0
    %634 = vmatpush2.msra.mxu0 0.0
    %635 = vmatprep.subr.mxu0 0.0
    %636 = vmatpush2.msra.mxu0 0.0
    %637 = vmatprep.subr.mxu0 0.0
    %638 = vmatpush2.msra.mxu0 0.0
    %639 = vmatprep.subr.mxu0 0.0
    %640 = vmatpush2.msra.mxu0 0.0
    %641 = vmatprep.subr.mxu0 0.0
    %642 = vmatpush2.msra.mxu0 0.0
    %643 = vmatprep.subr.mxu0 0.0
    %644 = vmatpush2.msra.mxu0 0.0
    %645 = vmatprep.subr.mxu0 0.0
    %646 = vmatpush2.msra.mxu0 0.0
    %647 = vmatprep.subr.mxu0 0.0
    %648 = vmatpush2.msra.mxu0 0.0
    %649 = vmatprep.mubr.f32.mxu0 0.0
    %650 = vmatmul.mubr.f32.gmra.mxu0 %v583
    %v651 = vpop.f32.mrf.mxu0
    %v652 = vadd.f32 0.0, %v651
    %v653 = vpop.f32.mrf.mxu0
    %654 = vdwg.mxu0
    %v655 = vadd.f32 %v579, %v652
    %v656 = vxor.u32 %v655, 2147483648
    %v657 = vmul.f32 %v656, 1.442695
    %v658 = vpow.pop %v657
    %v659 = vadd.f32 %v658, 1.0
    %v660 = vrcp.pop %v659
    %v661 = vmul.f32 1.0, %v660
    %v662 = vtanh.pop %v655
    %v663 = vmul.f32 %v661, %v570
    %665 = vrot.lane.b32.xlu0 %v662, 96
    %v666 = vpop.permute.xlu0 %665
    %v668 = vmul.f32 %v661, %v666
    %670 = vrot.lane.b32.xlu0 %v668, 16
    %v671 = vpop.permute.xlu0 %670
    %v673 = vadd.f32 %v663, %v671
    %v674 = vtanh.pop %v673
    %676 = vrot.lane.b32.xlu0 %v674, 32
    %v677 = vpop.permute.xlu0 %676
    %v679 = vmul.f32 %v661, %v677
    %s680 = scalar_lea.vmem [#allocation3], 40
    %v681 = vld [vmem:[%s680] sm:$0xff]
    %683 = vrot.lane.b32.xlu0 %v576, 80
    %v684 = vpop.permute.xlu0 %683
    %v685 = vsel %vm366, %v684, 0
    %687 = vmatprep.subr.mxu0 0.0
    %688 = vmatpush1.msra.mxu0 0.0
    %689 = vmatprep.subr.mxu0 0.0
    %690 = vmatpush1.msra.mxu0 0.0
    %691 = vmatprep.subr.mxu0 0.0
    %692 = vmatpush1.msra.mxu0 0.0
    %693 = vmatprep.subr.mxu0 0.0
    %694 = vmatpush1.msra.mxu0 0.0
    %695 = vmatprep.subr.mxu0 0.0
    %696 = vmatpush1.msra.mxu0 0.0
    %697 = vmatprep.subr.mxu0 0.0
    %698 = vmatpush1.msra.mxu0 0.0
    %699 = vmatprep.subr.mxu0 0.0
    %700 = vmatpush1.msra.mxu0 0.0
    %701 = vmatprep.subr.mxu0 0.0
    %702 = vmatpush1.msra.mxu0 0.0
    %703 = vmatprep.subr.mxu0 0.0
    %704 = vmatpush1.msra.mxu0 0.0
    %705 = vmatprep.subr.mxu0 0.0
    %706 = vmatpush1.msra.mxu0 0.0
    %707 = vmatprep.subr.mxu0 0.0
    %708 = vmatpush1.msra.mxu0 0.0
    %709 = vmatprep.subr.mxu0 0.0
    %710 = vmatpush1.msra.mxu0 0.0
    %711 = vmatprep.subr.mxu0 0.0
    %712 = vmatpush1.msra.mxu0 0.0
    %713 = vmatprep.subr.mxu0 0.0
    %714 = vmatpush1.msra.mxu0 0.0
    %715 = vmatprep.subr.mxu0 0.0
    %716 = vmatpush1.msra.mxu0 %v364
    %717 = vmatprep.subr.mxu0 0.0
    %718 = vmatpush1.msra.mxu0 %v363
    %719 = vmatprep.subr.mxu0 0.0
    %720 = vmatpush2.msra.mxu0 0.0
    %721 = vmatprep.subr.mxu0 0.0
    %722 = vmatpush2.msra.mxu0 0.0
    %723 = vmatprep.subr.mxu0 0.0
    %724 = vmatpush2.msra.mxu0 0.0
    %725 = vmatprep.subr.mxu0 0.0
    %726 = vmatpush2.msra.mxu0 0.0
    %727 = vmatprep.subr.mxu0 0.0
    %728 = vmatpush2.msra.mxu0 0.0
    %729 = vmatprep.subr.mxu0 0.0
    %730 = vmatpush2.msra.mxu0 0.0
    %731 = vmatprep.subr.mxu0 0.0
    %732 = vmatpush2.msra.mxu0 0.0
    %733 = vmatprep.subr.mxu0 0.0
    %734 = vmatpush2.msra.mxu0 0.0
    %735 = vmatprep.subr.mxu0 0.0
    %736 = vmatpush2.msra.mxu0 0.0
    %737 = vmatprep.subr.mxu0 0.0
    %738 = vmatpush2.msra.mxu0 0.0
    %739 = vmatprep.subr.mxu0 0.0
    %740 = vmatpush2.msra.mxu0 0.0
    %741 = vmatprep.subr.mxu0 0.0
    %742 = vmatpush2.msra.mxu0 0.0
    %743 = vmatprep.subr.mxu0 0.0
    %744 = vmatpush2.msra.mxu0 0.0
    %745 = vmatprep.subr.mxu0 0.0
    %746 = vmatpush2.msra.mxu0 0.0
    %747 = vmatprep.subr.mxu0 0.0
    %748 = vmatpush2.msra.mxu0 0.0
    %749 = vmatprep.subr.mxu0 0.0
    %750 = vmatpush2.msra.mxu0 0.0
    %751 = vmatprep.mubr.f32.mxu0 0.0
    %752 = vmatmul.mubr.f32.gmra.mxu0 %v685
    %v753 = vpop.f32.mrf.mxu0
    %v754 = vadd.f32 0.0, %v753
    %v755 = vpop.f32.mrf.mxu0
    %756 = vdwg.mxu0
    %v757 = vadd.f32 %v681, %v754
    %v758 = vxor.u32 %v757, 2147483648
    %v759 = vmul.f32 %v758, 1.442695
    %v760 = vpow.pop %v759
    %v761 = vadd.f32 %v760, 1.0
    %v762 = vrcp.pop %v761
    %v763 = vmul.f32 1.0, %v762
    %v764 = vtanh.pop %v757
    %v765 = vmul.f32 %v763, %v577
    %767 = vrot.lane.b32.xlu0 %v764, 96
    %v768 = vpop.permute.xlu0 %767
    %v770 = vmul.f32 %v763, %v768
    %772 = vrot.lane.b32.xlu0 %v770, 16
    %v773 = vpop.permute.xlu0 %772
    %v775 = vadd.f32 %v765, %v773
    %v776 = vtanh.pop %v775
    %778 = vrot.lane.b32.xlu0 %v776, 32
    %v779 = vpop.permute.xlu0 %778
    %v781 = vmul.f32 %v763, %v779
    %vm782 = vcmp.gt.s32.totalorder %v360, 1
    %vm783 = vcmp.gt.s32.totalorder %v360, 5
    %v784 = vsel %vm782, 1, 0
    %785 = vset.pattern.permute.xlu0 0
    %786 = vperm.xlu0 %785, %v784
    %v787 = vpop.permute.xlu0 %786
    %vm788 = vcmp.eq.s32.totalorder %v787, 1
    %v789 = vsel %vm788, %v679, %v569
    %v790 = vsel %vm788, %v673, %v570
    %v791 = vsel %vm783, 1, 0
    %792 = vset.pattern.permute.xlu0 0
    %793 = vperm.xlu0 %792, %v791
    %v794 = vpop.permute.xlu0 %793
    %vm795 = vcmp.eq.s32.totalorder %v794, 1
    %v796 = vsel %vm795, %v781, %v576
    %v797 = vsel %vm795, %v775, %v577
    %s798 = scalar_lea.vmem [#allocation2], 16
    %v799 = vld [vmem:[%s798] sm:$0xff]
    %801 = vrot.lane.b32.xlu0 %v789, 80
    %v802 = vpop.permute.xlu0 %801
    %v803 = vsel %vm366, %v802, 0
    %805 = vmatprep.subr.mxu0 0.0
    %806 = vmatpush1.msra.mxu0 0.0
    %807 = vmatprep.subr.mxu0 0.0
    %808 = vmatpush1.msra.mxu0 0.0
    %809 = vmatprep.subr.mxu0 0.0
    %810 = vmatpush1.msra.mxu0 0.0
    %811 = vmatprep.subr.mxu0 0.0
    %812 = vmatpush1.msra.mxu0 0.0
    %813 = vmatprep.subr.mxu0 0.0
    %814 = vmatpush1.msra.mxu0 0.0
    %815 = vmatprep.subr.mxu0 0.0
    %816 = vmatpush1.msra.mxu0 0.0
    %817 = vmatprep.subr.mxu0 0.0
    %818 = vmatpush1.msra.mxu0 0.0
    %819 = vmatprep.subr.mxu0 0.0
    %820 = vmatpush1.msra.mxu0 0.0
    %821 = vmatprep.subr.mxu0 0.0
    %822 = vmatpush1.msra.mxu0 0.0
    %823 = vmatprep.subr.mxu0 0.0
    %824 = vmatpush1.msra.mxu0 0.0
    %825 = vmatprep.subr.mxu0 0.0
    %826 = vmatpush1.msra.mxu0 0.0
    %827 = vmatprep.subr.mxu0 0.0
    %828 = vmatpush1.msra.mxu0 0.0
    %829 = vmatprep.subr.mxu0 0.0
    %830 = vmatpush1.msra.mxu0 0.0
    %831 = vmatprep.subr.mxu0 0.0
    %832 = vmatpush1.msra.mxu0 0.0
    %833 = vmatprep.subr.mxu0 0.0
    %834 = vmatpush1.msra.mxu0 %v362
    %835 = vmatprep.subr.mxu0 0.0
    %836 = vmatpush1.msra.mxu0 %v361
    %837 = vmatprep.subr.mxu0 0.0
    %838 = vmatpush2.msra.mxu0 0.0
    %839 = vmatprep.subr.mxu0 0.0
    %840 = vmatpush2.msra.mxu0 0.0
    %841 = vmatprep.subr.mxu0 0.0
    %842 = vmatpush2.msra.mxu0 0.0
    %843 = vmatprep.subr.mxu0 0.0
    %844 = vmatpush2.msra.mxu0 0.0
    %845 = vmatprep.subr.mxu0 0.0
    %846 = vmatpush2.msra.mxu0 0.0
    %847 = vmatprep.subr.mxu0 0.0
    %848 = vmatpush2.msra.mxu0 0.0
    %849 = vmatprep.subr.mxu0 0.0
    %850 = vmatpush2.msra.mxu0 0.0
    %851 = vmatprep.subr.mxu0 0.0
    %852 = vmatpush2.msra.mxu0 0.0
    %853 = vmatprep.subr.mxu0 0.0
    %854 = vmatpush2.msra.mxu0 0.0
    %855 = vmatprep.subr.mxu0 0.0
    %856 = vmatpush2.msra.mxu0 0.0
    %857 = vmatprep.subr.mxu0 0.0
    %858 = vmatpush2.msra.mxu0 0.0
    %859 = vmatprep.subr.mxu0 0.0
    %860 = vmatpush2.msra.mxu0 0.0
    %861 = vmatprep.subr.mxu0 0.0
    %862 = vmatpush2.msra.mxu0 0.0
    %863 = vmatprep.subr.mxu0 0.0
    %864 = vmatpush2.msra.mxu0 0.0
    %865 = vmatprep.subr.mxu0 0.0
    %866 = vmatpush2.msra.mxu0 0.0
    %867 = vmatprep.subr.mxu0 0.0
    %868 = vmatpush2.msra.mxu0 0.0
    %869 = vmatprep.mubr.f32.mxu0 0.0
    %870 = vmatmul.mubr.f32.gmra.mxu0 %v803
    %v871 = vpop.f32.mrf.mxu0
    %v872 = vadd.f32 0.0, %v871
    %v873 = vpop.f32.mrf.mxu0
    %874 = vdwg.mxu0
    %v875 = vadd.f32 %v799, %v872
    %v876 = vxor.u32 %v875, 2147483648
    %v877 = vmul.f32 %v876, 1.442695
    %v878 = vpow.pop %v877
    %v879 = vadd.f32 %v878, 1.0
    %v880 = vrcp.pop %v879
    %v881 = vmul.f32 1.0, %v880
    %v882 = vtanh.pop %v875
    %v883 = vmul.f32 %v881, %v790
    %885 = vrot.lane.b32.xlu0 %v882, 96
    %v886 = vpop.permute.xlu0 %885
    %v888 = vmul.f32 %v881, %v886
    %890 = vrot.lane.b32.xlu0 %v888, 16
    %v891 = vpop.permute.xlu0 %890
    %v893 = vadd.f32 %v883, %v891
    %v894 = vtanh.pop %v893
    %896 = vrot.lane.b32.xlu0 %v894, 32
    %v897 = vpop.permute.xlu0 %896
    %v899 = vmul.f32 %v881, %v897
    %s900 = scalar_lea.vmem [#allocation3], 32
    %v901 = vld [vmem:[%s900] sm:$0xff]
    %903 = vrot.lane.b32.xlu0 %v796, 80
    %v904 = vpop.permute.xlu0 %903
    %v905 = vsel %vm366, %v904, 0
    %907 = vmatprep.subr.mxu0 0.0
    %908 = vmatpush1.msra.mxu0 0.0
    %909 = vmatprep.subr.mxu0 0.0
    %910 = vmatpush1.msra.mxu0 0.0
    %911 = vmatprep.subr.mxu0 0.0
    %912 = vmatpush1.msra.mxu0 0.0
    %913 = vmatprep.subr.mxu0 0.0
    %914 = vmatpush1.msra.mxu0 0.0
    %915 = vmatprep.subr.mxu0 0.0
    %916 = vmatpush1.msra.mxu0 0.0
    %917 = vmatprep.subr.mxu0 0.0
    %918 = vmatpush1.msra.mxu0 0.0
    %919 = vmatprep.subr.mxu0 0.0
    %920 = vmatpush1.msra.mxu0 0.0
    %921 = vmatprep.subr.mxu0 0.0
    %922 = vmatpush1.msra.mxu0 0.0
    %923 = vmatprep.subr.mxu0 0.0
    %924 = vmatpush1.msra.mxu0 0.0
    %925 = vmatprep.subr.mxu0 0.0
    %926 = vmatpush1.msra.mxu0 0.0
    %927 = vmatprep.subr.mxu0 0.0
    %928 = vmatpush1.msra.mxu0 0.0
    %929 = vmatprep.subr.mxu0 0.0
    %930 = vmatpush1.msra.mxu0 0.0
    %931 = vmatprep.subr.mxu0 0.0
    %932 = vmatpush1.msra.mxu0 0.0
    %933 = vmatprep.subr.mxu0 0.0
    %934 = vmatpush1.msra.mxu0 0.0
    %935 = vmatprep.subr.mxu0 0.0
    %936 = vmatpush1.msra.mxu0 %v364
    %937 = vmatprep.subr.mxu0 0.0
    %938 = vmatpush1.msra.mxu0 %v363
    %939 = vmatprep.subr.mxu0 0.0
    %940 = vmatpush2.msra.mxu0 0.0
    %941 = vmatprep.subr.mxu0 0.0
    %942 = vmatpush2.msra.mxu0 0.0
    %943 = vmatprep.subr.mxu0 0.0
    %944 = vmatpush2.msra.mxu0 0.0
    %945 = vmatprep.subr.mxu0 0.0
    %946 = vmatpush2.msra.mxu0 0.0
    %947 = vmatprep.subr.mxu0 0.0
    %948 = vmatpush2.msra.mxu0 0.0
    %949 = vmatprep.subr.mxu0 0.0
    %950 = vmatpush2.msra.mxu0 0.0
    %951 = vmatprep.subr.mxu0 0.0
    %952 = vmatpush2.msra.mxu0 0.0
    %953 = vmatprep.subr.mxu0 0.0
    %954 = vmatpush2.msra.mxu0 0.0
    %955 = vmatprep.subr.mxu0 0.0
    %956 = vmatpush2.msra.mxu0 0.0
    %957 = vmatprep.subr.mxu0 0.0
    %958 = vmatpush2.msra.mxu0 0.0
    %959 = vmatprep.subr.mxu0 0.0
    %960 = vmatpush2.msra.mxu0 0.0
    %961 = vmatprep.subr.mxu0 0.0
    %962 = vmatpush2.msra.mxu0 0.0
    %963 = vmatprep.subr.mxu0 0.0
    %964 = vmatpush2.msra.mxu0 0.0
    %965 = vmatprep.subr.mxu0 0.0
    %966 = vmatpush2.msra.mxu0 0.0
    %967 = vmatprep.subr.mxu0 0.0
    %968 = vmatpush2.msra.mxu0 0.0
    %969 = vmatprep.subr.mxu0 0.0
    %970 = vmatpush2.msra.mxu0 0.0
    %971 = vmatprep.mubr.f32.mxu0 0.0
    %972 = vmatmul.mubr.f32.gmra.mxu0 %v905
    %v973 = vpop.f32.mrf.mxu0
    %v974 = vadd.f32 0.0, %v973
    %v975 = vpop.f32.mrf.mxu0
    %976 = vdwg.mxu0
    %v977 = vadd.f32 %v901, %v974
    %v978 = vxor.u32 %v977, 2147483648
    %v979 = vmul.f32 %v978, 1.442695
    %v980 = vpow.pop %v979
    %v981 = vadd.f32 %v980, 1.0
    %v982 = vrcp.pop %v981
    %v983 = vmul.f32 1.0, %v982
    %v984 = vtanh.pop %v977
    %v985 = vmul.f32 %v983, %v797
    %987 = vrot.lane.b32.xlu0 %v984, 96
    %v988 = vpop.permute.xlu0 %987
    %v990 = vmul.f32 %v983, %v988
    %992 = vrot.lane.b32.xlu0 %v990, 16
    %v993 = vpop.permute.xlu0 %992
    %v995 = vadd.f32 %v985, %v993
    %v996 = vtanh.pop %v995
    %998 = vrot.lane.b32.xlu0 %v996, 32
    %v999 = vpop.permute.xlu0 %998
    %v1001 = vmul.f32 %v983, %v999
    %vm1002 = vcmp.gt.s32.totalorder %v360, 2
    %vm1003 = vcmp.gt.s32.totalorder %v360, 4
    %v1004 = vsel %vm1002, 1, 0
    %1005 = vset.pattern.permute.xlu0 0
    %1006 = vperm.xlu0 %1005, %v1004
    %v1007 = vpop.permute.xlu0 %1006
    %vm1008 = vcmp.eq.s32.totalorder %v1007, 1
    %v1009 = vsel %vm1008, %v899, %v789
    %v1010 = vsel %vm1008, %v893, %v790
    %v1011 = vsel %vm1003, 1, 0
    %1012 = vset.pattern.permute.xlu0 0
    %1013 = vperm.xlu0 %1012, %v1011
    %v1014 = vpop.permute.xlu0 %1013
    %vm1015 = vcmp.eq.s32.totalorder %v1014, 1
    %v1016 = vsel %vm1015, %v1001, %v796
    %v1017 = vsel %vm1015, %v995, %v797
    %s1018 = scalar_lea.vmem [#allocation2], 24
    %v1019 = vld [vmem:[%s1018] sm:$0xff]
    %1021 = vrot.lane.b32.xlu0 %v1009, 80
    %v1022 = vpop.permute.xlu0 %1021
    %v1023 = vsel %vm366, %v1022, 0
    %1025 = vmatprep.subr.mxu0 0.0
    %1026 = vmatpush1.msra.mxu0 0.0
    %1027 = vmatprep.subr.mxu0 0.0
    %1028 = vmatpush1.msra.mxu0 0.0
    %1029 = vmatprep.subr.mxu0 0.0
    %1030 = vmatpush1.msra.mxu0 0.0
    %1031 = vmatprep.subr.mxu0 0.0
    %1032 = vmatpush1.msra.mxu0 0.0
    %1033 = vmatprep.subr.mxu0 0.0
    %1034 = vmatpush1.msra.mxu0 0.0
    %1035 = vmatprep.subr.mxu0 0.0
    %1036 = vmatpush1.msra.mxu0 0.0
    %1037 = vmatprep.subr.mxu0 0.0
    %1038 = vmatpush1.msra.mxu0 0.0
    %1039 = vmatprep.subr.mxu0 0.0
    %1040 = vmatpush1.msra.mxu0 0.0
    %1041 = vmatprep.subr.mxu0 0.0
    %1042 = vmatpush1.msra.mxu0 0.0
    %1043 = vmatprep.subr.mxu0 0.0
    %1044 = vmatpush1.msra.mxu0 0.0
    %1045 = vmatprep.subr.mxu0 0.0
    %1046 = vmatpush1.msra.mxu0 0.0
    %1047 = vmatprep.subr.mxu0 0.0
    %1048 = vmatpush1.msra.mxu0 0.0
    %1049 = vmatprep.subr.mxu0 0.0
    %1050 = vmatpush1.msra.mxu0 0.0
    %1051 = vmatprep.subr.mxu0 0.0
    %1052 = vmatpush1.msra.mxu0 0.0
    %1053 = vmatprep.subr.mxu0 0.0
    %1054 = vmatpush1.msra.mxu0 %v362
    %1055 = vmatprep.subr.mxu0 0.0
    %1056 = vmatpush1.msra.mxu0 %v361
    %1057 = vmatprep.subr.mxu0 0.0
    %1058 = vmatpush2.msra.mxu0 0.0
    %1059 = vmatprep.subr.mxu0 0.0
    %1060 = vmatpush2.msra.mxu0 0.0
    %1061 = vmatprep.subr.mxu0 0.0
    %1062 = vmatpush2.msra.mxu0 0.0
    %1063 = vmatprep.subr.mxu0 0.0
    %1064 = vmatpush2.msra.mxu0 0.0
    %1065 = vmatprep.subr.mxu0 0.0
    %1066 = vmatpush2.msra.mxu0 0.0
    %1067 = vmatprep.subr.mxu0 0.0
    %1068 = vmatpush2.msra.mxu0 0.0
    %1069 = vmatprep.subr.mxu0 0.0
    %1070 = vmatpush2.msra.mxu0 0.0
    %1071 = vmatprep.subr.mxu0 0.0
    %1072 = vmatpush2.msra.mxu0 0.0
    %1073 = vmatprep.subr.mxu0 0.0
    %1074 = vmatpush2.msra.mxu0 0.0
    %1075 = vmatprep.subr.mxu0 0.0
    %1076 = vmatpush2.msra.mxu0 0.0
    %1077 = vmatprep.subr.mxu0 0.0
    %1078 = vmatpush2.msra.mxu0 0.0
    %1079 = vmatprep.subr.mxu0 0.0
    %1080 = vmatpush2.msra.mxu0 0.0
    %1081 = vmatprep.subr.mxu0 0.0
    %1082 = vmatpush2.msra.mxu0 0.0
    %1083 = vmatprep.subr.mxu0 0.0
    %1084 = vmatpush2.msra.mxu0 0.0
    %1085 = vmatprep.subr.mxu0 0.0
    %1086 = vmatpush2.msra.mxu0 0.0
    %1087 = vmatprep.subr.mxu0 0.0
    %1088 = vmatpush2.msra.mxu0 0.0
    %1089 = vmatprep.mubr.f32.mxu0 0.0
    %1090 = vmatmul.mubr.f32.gmra.mxu0 %v1023
    %v1091 = vpop.f32.mrf.mxu0
    %v1092 = vadd.f32 0.0, %v1091
    %v1093 = vpop.f32.mrf.mxu0
    %1094 = vdwg.mxu0
    %v1095 = vadd.f32 %v1019, %v1092
    %v1096 = vxor.u32 %v1095, 2147483648
    %v1097 = vmul.f32 %v1096, 1.442695
    %v1098 = vpow.pop %v1097
    %v1099 = vadd.f32 %v1098, 1.0
    %v1100 = vrcp.pop %v1099
    %v1101 = vmul.f32 1.0, %v1100
    %v1102 = vtanh.pop %v1095
    %v1103 = vmul.f32 %v1101, %v1010
    %1105 = vrot.lane.b32.xlu0 %v1102, 96
    %v1106 = vpop.permute.xlu0 %1105
    %v1108 = vmul.f32 %v1101, %v1106
    %1110 = vrot.lane.b32.xlu0 %v1108, 16
    %v1111 = vpop.permute.xlu0 %1110
    %v1113 = vadd.f32 %v1103, %v1111
    %v1114 = vtanh.pop %v1113
    %1116 = vrot.lane.b32.xlu0 %v1114, 32
    %v1117 = vpop.permute.xlu0 %1116
    %v1119 = vmul.f32 %v1101, %v1117
    %s1120 = scalar_lea.vmem [#allocation3], 24
    %v1121 = vld [vmem:[%s1120] sm:$0xff]
    %1123 = vrot.lane.b32.xlu0 %v1016, 80
    %v1124 = vpop.permute.xlu0 %1123
    %v1125 = vsel %vm366, %v1124, 0
    %1127 = vmatprep.subr.mxu0 0.0
    %1128 = vmatpush1.msra.mxu0 0.0
    %1129 = vmatprep.subr.mxu0 0.0
    %1130 = vmatpush1.msra.mxu0 0.0
    %1131 = vmatprep.subr.mxu0 0.0
    %1132 = vmatpush1.msra.mxu0 0.0
    %1133 = vmatprep.subr.mxu0 0.0
    %1134 = vmatpush1.msra.mxu0 0.0
    %1135 = vmatprep.subr.mxu0 0.0
    %1136 = vmatpush1.msra.mxu0 0.0
    %1137 = vmatprep.subr.mxu0 0.0
    %1138 = vmatpush1.msra.mxu0 0.0
    %1139 = vmatprep.subr.mxu0 0.0
    %1140 = vmatpush1.msra.mxu0 0.0
    %1141 = vmatprep.subr.mxu0 0.0
    %1142 = vmatpush1.msra.mxu0 0.0
    %1143 = vmatprep.subr.mxu0 0.0
    %1144 = vmatpush1.msra.mxu0 0.0
    %1145 = vmatprep.subr.mxu0 0.0
    %1146 = vmatpush1.msra.mxu0 0.0
    %1147 = vmatprep.subr.mxu0 0.0
    %1148 = vmatpush1.msra.mxu0 0.0
    %1149 = vmatprep.subr.mxu0 0.0
    %1150 = vmatpush1.msra.mxu0 0.0
    %1151 = vmatprep.subr.mxu0 0.0
    %1152 = vmatpush1.msra.mxu0 0.0
    %1153 = vmatprep.subr.mxu0 0.0
    %1154 = vmatpush1.msra.mxu0 0.0
    %1155 = vmatprep.subr.mxu0 0.0
    %1156 = vmatpush1.msra.mxu0 %v364
    %1157 = vmatprep.subr.mxu0 0.0
    %1158 = vmatpush1.msra.mxu0 %v363
    %1159 = vmatprep.subr.mxu0 0.0
    %1160 = vmatpush2.msra.mxu0 0.0
    %1161 = vmatprep.subr.mxu0 0.0
    %1162 = vmatpush2.msra.mxu0 0.0
    %1163 = vmatprep.subr.mxu0 0.0
    %1164 = vmatpush2.msra.mxu0 0.0
    %1165 = vmatprep.subr.mxu0 0.0
    %1166 = vmatpush2.msra.mxu0 0.0
    %1167 = vmatprep.subr.mxu0 0.0
    %1168 = vmatpush2.msra.mxu0 0.0
    %1169 = vmatprep.subr.mxu0 0.0
    %1170 = vmatpush2.msra.mxu0 0.0
    %1171 = vmatprep.subr.mxu0 0.0
    %1172 = vmatpush2.msra.mxu0 0.0
    %1173 = vmatprep.subr.mxu0 0.0
    %1174 = vmatpush2.msra.mxu0 0.0
    %1175 = vmatprep.subr.mxu0 0.0
    %1176 = vmatpush2.msra.mxu0 0.0
    %1177 = vmatprep.subr.mxu0 0.0
    %1178 = vmatpush2.msra.mxu0 0.0
    %1179 = vmatprep.subr.mxu0 0.0
    %1180 = vmatpush2.msra.mxu0 0.0
    %1181 = vmatprep.subr.mxu0 0.0
    %1182 = vmatpush2.msra.mxu0 0.0
    %1183 = vmatprep.subr.mxu0 0.0
    %1184 = vmatpush2.msra.mxu0 0.0
    %1185 = vmatprep.subr.mxu0 0.0
    %1186 = vmatpush2.msra.mxu0 0.0
    %1187 = vmatprep.subr.mxu0 0.0
    %1188 = vmatpush2.msra.mxu0 0.0
    %1189 = vmatprep.subr.mxu0 0.0
    %1190 = vmatpush2.msra.mxu0 0.0
    %1191 = vmatprep.mubr.f32.mxu0 0.0
    %1192 = vmatmul.mubr.f32.gmra.mxu0 %v1125
    %v1193 = vpop.f32.mrf.mxu0
    %v1194 = vadd.f32 0.0, %v1193
    %v1195 = vpop.f32.mrf.mxu0
    %1196 = vdwg.mxu0
    %v1197 = vadd.f32 %v1121, %v1194
    %v1198 = vxor.u32 %v1197, 2147483648
    %v1199 = vmul.f32 %v1198, 1.442695
    %v1200 = vpow.pop %v1199
    %v1201 = vadd.f32 %v1200, 1.0
    %v1202 = vrcp.pop %v1201
    %v1203 = vmul.f32 1.0, %v1202
    %v1204 = vtanh.pop %v1197
    %v1205 = vmul.f32 %v1203, %v1017
    %1207 = vrot.lane.b32.xlu0 %v1204, 96
    %v1208 = vpop.permute.xlu0 %1207
    %v1210 = vmul.f32 %v1203, %v1208
    %1212 = vrot.lane.b32.xlu0 %v1210, 16
    %v1213 = vpop.permute.xlu0 %1212
    %v1215 = vadd.f32 %v1205, %v1213
    %v1216 = vtanh.pop %v1215
    %1218 = vrot.lane.b32.xlu0 %v1216, 32
    %v1219 = vpop.permute.xlu0 %1218
    %v1221 = vmul.f32 %v1203, %v1219
    %vm1222 = vcmp.gt.s32.totalorder %v360, 3
    %v1223 = vsel %vm1222, 1, 0
    %1224 = vset.pattern.permute.xlu0 0
    %1225 = vperm.xlu0 %1224, %v1223
    %v1226 = vpop.permute.xlu0 %1225
    %vm1227 = vcmp.eq.s32.totalorder %v1226, 1
    %v1228 = vsel %vm1227, %v1119, %v1009
    %v1229 = vsel %vm1227, %v1113, %v1010
    %v1230 = vsel %vm1227, %v1221, %v1016
    %v1231 = vsel %vm1227, %v1215, %v1017
    %s1232 = scalar_lea.vmem [#allocation2], 32
    %v1233 = vld [vmem:[%s1232] sm:$0xff]
    %1235 = vrot.lane.b32.xlu0 %v1228, 80
    %v1236 = vpop.permute.xlu0 %1235
    %v1237 = vsel %vm366, %v1236, 0
    %1239 = vmatprep.subr.mxu0 0.0
    %1240 = vmatpush1.msra.mxu0 0.0
    %1241 = vmatprep.subr.mxu0 0.0
    %1242 = vmatpush1.msra.mxu0 0.0
    %1243 = vmatprep.subr.mxu0 0.0
    %1244 = vmatpush1.msra.mxu0 0.0
    %1245 = vmatprep.subr.mxu0 0.0
    %1246 = vmatpush1.msra.mxu0 0.0
    %1247 = vmatprep.subr.mxu0 0.0
    %1248 = vmatpush1.msra.mxu0 0.0
    %1249 = vmatprep.subr.mxu0 0.0
    %1250 = vmatpush1.msra.mxu0 0.0
    %1251 = vmatprep.subr.mxu0 0.0
    %1252 = vmatpush1.msra.mxu0 0.0
    %1253 = vmatprep.subr.mxu0 0.0
    %1254 = vmatpush1.msra.mxu0 0.0
    %1255 = vmatprep.subr.mxu0 0.0
    %1256 = vmatpush1.msra.mxu0 0.0
    %1257 = vmatprep.subr.mxu0 0.0
    %1258 = vmatpush1.msra.mxu0 0.0
    %1259 = vmatprep.subr.mxu0 0.0
    %1260 = vmatpush1.msra.mxu0 0.0
    %1261 = vmatprep.subr.mxu0 0.0
    %1262 = vmatpush1.msra.mxu0 0.0
    %1263 = vmatprep.subr.mxu0 0.0
    %1264 = vmatpush1.msra.mxu0 0.0
    %1265 = vmatprep.subr.mxu0 0.0
    %1266 = vmatpush1.msra.mxu0 0.0
    %1267 = vmatprep.subr.mxu0 0.0
    %1268 = vmatpush1.msra.mxu0 %v362
    %1269 = vmatprep.subr.mxu0 0.0
    %1270 = vmatpush1.msra.mxu0 %v361
    %1271 = vmatprep.subr.mxu0 0.0
    %1272 = vmatpush2.msra.mxu0 0.0
    %1273 = vmatprep.subr.mxu0 0.0
    %1274 = vmatpush2.msra.mxu0 0.0
    %1275 = vmatprep.subr.mxu0 0.0
    %1276 = vmatpush2.msra.mxu0 0.0
    %1277 = vmatprep.subr.mxu0 0.0
    %1278 = vmatpush2.msra.mxu0 0.0
    %1279 = vmatprep.subr.mxu0 0.0
    %1280 = vmatpush2.msra.mxu0 0.0
    %1281 = vmatprep.subr.mxu0 0.0
    %1282 = vmatpush2.msra.mxu0 0.0
    %1283 = vmatprep.subr.mxu0 0.0
    %1284 = vmatpush2.msra.mxu0 0.0
    %1285 = vmatprep.subr.mxu0 0.0
    %1286 = vmatpush2.msra.mxu0 0.0
    %1287 = vmatprep.subr.mxu0 0.0
    %1288 = vmatpush2.msra.mxu0 0.0
    %1289 = vmatprep.subr.mxu0 0.0
    %1290 = vmatpush2.msra.mxu0 0.0
    %1291 = vmatprep.subr.mxu0 0.0
    %1292 = vmatpush2.msra.mxu0 0.0
    %1293 = vmatprep.subr.mxu0 0.0
    %1294 = vmatpush2.msra.mxu0 0.0
    %1295 = vmatprep.subr.mxu0 0.0
    %1296 = vmatpush2.msra.mxu0 0.0
    %1297 = vmatprep.subr.mxu0 0.0
    %1298 = vmatpush2.msra.mxu0 0.0
    %1299 = vmatprep.subr.mxu0 0.0
    %1300 = vmatpush2.msra.mxu0 0.0
    %1301 = vmatprep.subr.mxu0 0.0
    %1302 = vmatpush2.msra.mxu0 0.0
    %1303 = vmatprep.mubr.f32.mxu0 0.0
    %1304 = vmatmul.mubr.f32.gmra.mxu0 %v1237
    %v1305 = vpop.f32.mrf.mxu0
    %v1306 = vadd.f32 0.0, %v1305
    %v1307 = vpop.f32.mrf.mxu0
    %1308 = vdwg.mxu0
    %v1309 = vadd.f32 %v1233, %v1306
    %v1310 = vxor.u32 %v1309, 2147483648
    %v1311 = vmul.f32 %v1310, 1.442695
    %v1312 = vpow.pop %v1311
    %v1313 = vadd.f32 %v1312, 1.0
    %v1314 = vrcp.pop %v1313
    %v1315 = vmul.f32 1.0, %v1314
    %v1316 = vtanh.pop %v1309
    %v1317 = vmul.f32 %v1315, %v1229
    %1319 = vrot.lane.b32.xlu0 %v1316, 96
    %v1320 = vpop.permute.xlu0 %1319
    %v1322 = vmul.f32 %v1315, %v1320
    %1324 = vrot.lane.b32.xlu0 %v1322, 16
    %v1325 = vpop.permute.xlu0 %1324
    %v1327 = vadd.f32 %v1317, %v1325
    %v1328 = vtanh.pop %v1327
    %1330 = vrot.lane.b32.xlu0 %v1328, 32
    %v1331 = vpop.permute.xlu0 %1330
    %v1333 = vmul.f32 %v1315, %v1331
    %s1334 = scalar_lea.vmem [#allocation3], 16
    %v1335 = vld [vmem:[%s1334] sm:$0xff]
    %1337 = vrot.lane.b32.xlu0 %v1230, 80
    %v1338 = vpop.permute.xlu0 %1337
    %v1339 = vsel %vm366, %v1338, 0
    %1341 = vmatprep.subr.mxu0 0.0
    %1342 = vmatpush1.msra.mxu0 0.0
    %1343 = vmatprep.subr.mxu0 0.0
    %1344 = vmatpush1.msra.mxu0 0.0
    %1345 = vmatprep.subr.mxu0 0.0
    %1346 = vmatpush1.msra.mxu0 0.0
    %1347 = vmatprep.subr.mxu0 0.0
    %1348 = vmatpush1.msra.mxu0 0.0
    %1349 = vmatprep.subr.mxu0 0.0
    %1350 = vmatpush1.msra.mxu0 0.0
    %1351 = vmatprep.subr.mxu0 0.0
    %1352 = vmatpush1.msra.mxu0 0.0
    %1353 = vmatprep.subr.mxu0 0.0
    %1354 = vmatpush1.msra.mxu0 0.0
    %1355 = vmatprep.subr.mxu0 0.0
    %1356 = vmatpush1.msra.mxu0 0.0
    %1357 = vmatprep.subr.mxu0 0.0
    %1358 = vmatpush1.msra.mxu0 0.0
    %1359 = vmatprep.subr.mxu0 0.0
    %1360 = vmatpush1.msra.mxu0 0.0
    %1361 = vmatprep.subr.mxu0 0.0
    %1362 = vmatpush1.msra.mxu0 0.0
    %1363 = vmatprep.subr.mxu0 0.0
    %1364 = vmatpush1.msra.mxu0 0.0
    %1365 = vmatprep.subr.mxu0 0.0
    %1366 = vmatpush1.msra.mxu0 0.0
    %1367 = vmatprep.subr.mxu0 0.0
    %1368 = vmatpush1.msra.mxu0 0.0
    %1369 = vmatprep.subr.mxu0 0.0
    %1370 = vmatpush1.msra.mxu0 %v364
    %1371 = vmatprep.subr.mxu0 0.0
    %1372 = vmatpush1.msra.mxu0 %v363
    %1373 = vmatprep.subr.mxu0 0.0
    %1374 = vmatpush2.msra.mxu0 0.0
    %1375 = vmatprep.subr.mxu0 0.0
    %1376 = vmatpush2.msra.mxu0 0.0
    %1377 = vmatprep.subr.mxu0 0.0
    %1378 = vmatpush2.msra.mxu0 0.0
    %1379 = vmatprep.subr.mxu0 0.0
    %1380 = vmatpush2.msra.mxu0 0.0
    %1381 = vmatprep.subr.mxu0 0.0
    %1382 = vmatpush2.msra.mxu0 0.0
    %1383 = vmatprep.subr.mxu0 0.0
    %1384 = vmatpush2.msra.mxu0 0.0
    %1385 = vmatprep.subr.mxu0 0.0
    %1386 = vmatpush2.msra.mxu0 0.0
    %1387 = vmatprep.subr.mxu0 0.0
    %1388 = vmatpush2.msra.mxu0 0.0
    %1389 = vmatprep.subr.mxu0 0.0
    %1390 = vmatpush2.msra.mxu0 0.0
    %1391 = vmatprep.subr.mxu0 0.0
    %1392 = vmatpush2.msra.mxu0 0.0
    %1393 = vmatprep.subr.mxu0 0.0
    %1394 = vmatpush2.msra.mxu0 0.0
    %1395 = vmatprep.subr.mxu0 0.0
    %1396 = vmatpush2.msra.mxu0 0.0
    %1397 = vmatprep.subr.mxu0 0.0
    %1398 = vmatpush2.msra.mxu0 0.0
    %1399 = vmatprep.subr.mxu0 0.0
    %1400 = vmatpush2.msra.mxu0 0.0
    %1401 = vmatprep.subr.mxu0 0.0
    %1402 = vmatpush2.msra.mxu0 0.0
    %1403 = vmatprep.subr.mxu0 0.0
    %1404 = vmatpush2.msra.mxu0 0.0
    %1405 = vmatprep.mubr.f32.mxu0 0.0
    %1406 = vmatmul.mubr.f32.gmra.mxu0 %v1339
    %v1407 = vpop.f32.mrf.mxu0
    %v1408 = vadd.f32 0.0, %v1407
    %v1409 = vpop.f32.mrf.mxu0
    %1410 = vdwg.mxu0
    %v1411 = vadd.f32 %v1335, %v1408
    %v1412 = vxor.u32 %v1411, 2147483648
    %v1413 = vmul.f32 %v1412, 1.442695
    %v1414 = vpow.pop %v1413
    %v1415 = vadd.f32 %v1414, 1.0
    %v1416 = vrcp.pop %v1415
    %v1417 = vmul.f32 1.0, %v1416
    %v1418 = vtanh.pop %v1411
    %v1419 = vmul.f32 %v1417, %v1231
    %1421 = vrot.lane.b32.xlu0 %v1418, 96
    %v1422 = vpop.permute.xlu0 %1421
    %v1424 = vmul.f32 %v1417, %v1422
    %1426 = vrot.lane.b32.xlu0 %v1424, 16
    %v1427 = vpop.permute.xlu0 %1426
    %v1429 = vadd.f32 %v1419, %v1427
    %v1430 = vtanh.pop %v1429
    %1432 = vrot.lane.b32.xlu0 %v1430, 32
    %v1433 = vpop.permute.xlu0 %1432
    %v1435 = vmul.f32 %v1417, %v1433
    %v1436 = vsel %vm1015, %v1333, %v1228
    %v1437 = vsel %vm1015, %v1327, %v1229
    %v1438 = vsel %vm1008, %v1435, %v1230
    %v1439 = vsel %vm1008, %v1429, %v1231
    %s1440 = scalar_lea.vmem [#allocation2], 40
    %v1441 = vld [vmem:[%s1440] sm:$0xff]
    %1443 = vrot.lane.b32.xlu0 %v1436, 80
    %v1444 = vpop.permute.xlu0 %1443
    %v1445 = vsel %vm366, %v1444, 0
    %1447 = vmatprep.subr.mxu0 0.0
    %1448 = vmatpush1.msra.mxu0 0.0
    %1449 = vmatprep.subr.mxu0 0.0
    %1450 = vmatpush1.msra.mxu0 0.0
    %1451 = vmatprep.subr.mxu0 0.0
    %1452 = vmatpush1.msra.mxu0 0.0
    %1453 = vmatprep.subr.mxu0 0.0
    %1454 = vmatpush1.msra.mxu0 0.0
    %1455 = vmatprep.subr.mxu0 0.0
    %1456 = vmatpush1.msra.mxu0 0.0
    %1457 = vmatprep.subr.mxu0 0.0
    %1458 = vmatpush1.msra.mxu0 0.0
    %1459 = vmatprep.subr.mxu0 0.0
    %1460 = vmatpush1.msra.mxu0 0.0
    %1461 = vmatprep.subr.mxu0 0.0
    %1462 = vmatpush1.msra.mxu0 0.0
    %1463 = vmatprep.subr.mxu0 0.0
    %1464 = vmatpush1.msra.mxu0 0.0
    %1465 = vmatprep.subr.mxu0 0.0
    %1466 = vmatpush1.msra.mxu0 0.0
    %1467 = vmatprep.subr.mxu0 0.0
    %1468 = vmatpush1.msra.mxu0 0.0
    %1469 = vmatprep.subr.mxu0 0.0
    %1470 = vmatpush1.msra.mxu0 0.0
    %1471 = vmatprep.subr.mxu0 0.0
    %1472 = vmatpush1.msra.mxu0 0.0
    %1473 = vmatprep.subr.mxu0 0.0
    %1474 = vmatpush1.msra.mxu0 0.0
    %1475 = vmatprep.subr.mxu0 0.0
    %1476 = vmatpush1.msra.mxu0 %v362
    %1477 = vmatprep.subr.mxu0 0.0
    %1478 = vmatpush1.msra.mxu0 %v361
    %1479 = vmatprep.subr.mxu0 0.0
    %1480 = vmatpush2.msra.mxu0 0.0
    %1481 = vmatprep.subr.mxu0 0.0
    %1482 = vmatpush2.msra.mxu0 0.0
    %1483 = vmatprep.subr.mxu0 0.0
    %1484 = vmatpush2.msra.mxu0 0.0
    %1485 = vmatprep.subr.mxu0 0.0
    %1486 = vmatpush2.msra.mxu0 0.0
    %1487 = vmatprep.subr.mxu0 0.0
    %1488 = vmatpush2.msra.mxu0 0.0
    %1489 = vmatprep.subr.mxu0 0.0
    %1490 = vmatpush2.msra.mxu0 0.0
    %1491 = vmatprep.subr.mxu0 0.0
    %1492 = vmatpush2.msra.mxu0 0.0
    %1493 = vmatprep.subr.mxu0 0.0
    %1494 = vmatpush2.msra.mxu0 0.0
    %1495 = vmatprep.subr.mxu0 0.0
    %1496 = vmatpush2.msra.mxu0 0.0
    %1497 = vmatprep.subr.mxu0 0.0
    %1498 = vmatpush2.msra.mxu0 0.0
    %1499 = vmatprep.subr.mxu0 0.0
    %1500 = vmatpush2.msra.mxu0 0.0
    %1501 = vmatprep.subr.mxu0 0.0
    %1502 = vmatpush2.msra.mxu0 0.0
    %1503 = vmatprep.subr.mxu0 0.0
    %1504 = vmatpush2.msra.mxu0 0.0
    %1505 = vmatprep.subr.mxu0 0.0
    %1506 = vmatpush2.msra.mxu0 0.0
    %1507 = vmatprep.subr.mxu0 0.0
    %1508 = vmatpush2.msra.mxu0 0.0
    %1509 = vmatprep.subr.mxu0 0.0
    %1510 = vmatpush2.msra.mxu0 0.0
    %1511 = vmatprep.mubr.f32.mxu0 0.0
    %1512 = vmatmul.mubr.f32.gmra.mxu0 %v1445
    %v1513 = vpop.f32.mrf.mxu0
    %v1514 = vadd.f32 0.0, %v1513
    %v1515 = vpop.f32.mrf.mxu0
    %1516 = vdwg.mxu0
    %v1517 = vadd.f32 %v1441, %v1514
    %v1518 = vxor.u32 %v1517, 2147483648
    %v1519 = vmul.f32 %v1518, 1.442695
    %v1520 = vpow.pop %v1519
    %v1521 = vadd.f32 %v1520, 1.0
    %v1522 = vrcp.pop %v1521
    %v1523 = vmul.f32 1.0, %v1522
    %v1524 = vtanh.pop %v1517
    %v1525 = vmul.f32 %v1523, %v1437
    %1527 = vrot.lane.b32.xlu0 %v1524, 96
    %v1528 = vpop.permute.xlu0 %1527
    %v1530 = vmul.f32 %v1523, %v1528
    %1532 = vrot.lane.b32.xlu0 %v1530, 16
    %v1533 = vpop.permute.xlu0 %1532
    %v1535 = vadd.f32 %v1525, %v1533
    %v1536 = vtanh.pop %v1535
    %1538 = vrot.lane.b32.xlu0 %v1536, 32
    %v1539 = vpop.permute.xlu0 %1538
    %v1541 = vmul.f32 %v1523, %v1539
    %s1542 = scalar_lea.vmem [#allocation3], 8
    %v1543 = vld [vmem:[%s1542] sm:$0xff]
    %1545 = vrot.lane.b32.xlu0 %v1438, 80
    %v1546 = vpop.permute.xlu0 %1545
    %v1547 = vsel %vm366, %v1546, 0
    %1549 = vmatprep.subr.mxu0 0.0
    %1550 = vmatpush1.msra.mxu0 0.0
    %1551 = vmatprep.subr.mxu0 0.0
    %1552 = vmatpush1.msra.mxu0 0.0
    %1553 = vmatprep.subr.mxu0 0.0
    %1554 = vmatpush1.msra.mxu0 0.0
    %1555 = vmatprep.subr.mxu0 0.0
    %1556 = vmatpush1.msra.mxu0 0.0
    %1557 = vmatprep.subr.mxu0 0.0
    %1558 = vmatpush1.msra.mxu0 0.0
    %1559 = vmatprep.subr.mxu0 0.0
    %1560 = vmatpush1.msra.mxu0 0.0
    %1561 = vmatprep.subr.mxu0 0.0
    %1562 = vmatpush1.msra.mxu0 0.0
    %1563 = vmatprep.subr.mxu0 0.0
    %1564 = vmatpush1.msra.mxu0 0.0
    %1565 = vmatprep.subr.mxu0 0.0
    %1566 = vmatpush1.msra.mxu0 0.0
    %1567 = vmatprep.subr.mxu0 0.0
    %1568 = vmatpush1.msra.mxu0 0.0
    %1569 = vmatprep.subr.mxu0 0.0
    %1570 = vmatpush1.msra.mxu0 0.0
    %1571 = vmatprep.subr.mxu0 0.0
    %1572 = vmatpush1.msra.mxu0 0.0
    %1573 = vmatprep.subr.mxu0 0.0
    %1574 = vmatpush1.msra.mxu0 0.0
    %1575 = vmatprep.subr.mxu0 0.0
    %1576 = vmatpush1.msra.mxu0 0.0
    %1577 = vmatprep.subr.mxu0 0.0
    %1578 = vmatpush1.msra.mxu0 %v364
    %1579 = vmatprep.subr.mxu0 0.0
    %1580 = vmatpush1.msra.mxu0 %v363
    %1581 = vmatprep.subr.mxu0 0.0
    %1582 = vmatpush2.msra.mxu0 0.0
    %1583 = vmatprep.subr.mxu0 0.0
    %1584 = vmatpush2.msra.mxu0 0.0
    %1585 = vmatprep.subr.mxu0 0.0
    %1586 = vmatpush2.msra.mxu0 0.0
    %1587 = vmatprep.subr.mxu0 0.0
    %1588 = vmatpush2.msra.mxu0 0.0
    %1589 = vmatprep.subr.mxu0 0.0
    %1590 = vmatpush2.msra.mxu0 0.0
    %1591 = vmatprep.subr.mxu0 0.0
    %1592 = vmatpush2.msra.mxu0 0.0
    %1593 = vmatprep.subr.mxu0 0.0
    %1594 = vmatpush2.msra.mxu0 0.0
    %1595 = vmatprep.subr.mxu0 0.0
    %1596 = vmatpush2.msra.mxu0 0.0
    %1597 = vmatprep.subr.mxu0 0.0
    %1598 = vmatpush2.msra.mxu0 0.0
    %1599 = vmatprep.subr.mxu0 0.0
    %1600 = vmatpush2.msra.mxu0 0.0
    %1601 = vmatprep.subr.mxu0 0.0
    %1602 = vmatpush2.msra.mxu0 0.0
    %1603 = vmatprep.subr.mxu0 0.0
    %1604 = vmatpush2.msra.mxu0 0.0
    %1605 = vmatprep.subr.mxu0 0.0
    %1606 = vmatpush2.msra.mxu0 0.0
    %1607 = vmatprep.subr.mxu0 0.0
    %1608 = vmatpush2.msra.mxu0 0.0
    %1609 = vmatprep.subr.mxu0 0.0
    %1610 = vmatpush2.msra.mxu0 0.0
    %1611 = vmatprep.subr.mxu0 0.0
    %1612 = vmatpush2.msra.mxu0 0.0
    %1613 = vmatprep.mubr.f32.mxu0 0.0
    %1614 = vmatmul.mubr.f32.gmra.mxu0 %v1547
    %v1615 = vpop.f32.mrf.mxu0
    %v1616 = vadd.f32 0.0, %v1615
    %v1617 = vpop.f32.mrf.mxu0
    %1618 = vdwg.mxu0
    %v1619 = vadd.f32 %v1543, %v1616
    %v1620 = vxor.u32 %v1619, 2147483648
    %v1621 = vmul.f32 %v1620, 1.442695
    %v1622 = vpow.pop %v1621
    %v1623 = vadd.f32 %v1622, 1.0
    %v1624 = vrcp.pop %v1623
    %v1625 = vmul.f32 1.0, %v1624
    %v1626 = vtanh.pop %v1619
    %v1627 = vmul.f32 %v1625, %v1439
    %1629 = vrot.lane.b32.xlu0 %v1626, 96
    %v1630 = vpop.permute.xlu0 %1629
    %v1632 = vmul.f32 %v1625, %v1630
    %1634 = vrot.lane.b32.xlu0 %v1632, 16
    %v1635 = vpop.permute.xlu0 %1634
    %v1637 = vadd.f32 %v1627, %v1635
    %v1638 = vtanh.pop %v1637
    %1640 = vrot.lane.b32.xlu0 %v1638, 32
    %v1641 = vpop.permute.xlu0 %1640
    %v1643 = vmul.f32 %v1625, %v1641
    %v1644 = vsel %vm795, %v1541, %v1436
    %v1645 = vsel %vm795, %v1535, %v1437
    %v1646 = vsel %vm788, %v1643, %v1438
    %v1647 = vsel %vm788, %v1637, %v1439
    %s1648 = scalar_lea.vmem [#allocation2], 48
    %v1649 = vld [vmem:[%s1648] sm:$0xff]
    %1651 = vrot.lane.b32.xlu0 %v1644, 80
    %v1652 = vpop.permute.xlu0 %1651
    %v1653 = vsel %vm366, %v1652, 0
    %1655 = vmatprep.subr.mxu0 0.0
    %1656 = vmatpush1.msra.mxu0 0.0
    %1657 = vmatprep.subr.mxu0 0.0
    %1658 = vmatpush1.msra.mxu0 0.0
    %1659 = vmatprep.subr.mxu0 0.0
    %1660 = vmatpush1.msra.mxu0 0.0
    %1661 = vmatprep.subr.mxu0 0.0
    %1662 = vmatpush1.msra.mxu0 0.0
    %1663 = vmatprep.subr.mxu0 0.0
    %1664 = vmatpush1.msra.mxu0 0.0
    %1665 = vmatprep.subr.mxu0 0.0
    %1666 = vmatpush1.msra.mxu0 0.0
    %1667 = vmatprep.subr.mxu0 0.0
    %1668 = vmatpush1.msra.mxu0 0.0
    %1669 = vmatprep.subr.mxu0 0.0
    %1670 = vmatpush1.msra.mxu0 0.0
    %1671 = vmatprep.subr.mxu0 0.0
    %1672 = vmatpush1.msra.mxu0 0.0
    %1673 = vmatprep.subr.mxu0 0.0
    %1674 = vmatpush1.msra.mxu0 0.0
    %1675 = vmatprep.subr.mxu0 0.0
    %1676 = vmatpush1.msra.mxu0 0.0
    %1677 = vmatprep.subr.mxu0 0.0
    %1678 = vmatpush1.msra.mxu0 0.0
    %1679 = vmatprep.subr.mxu0 0.0
    %1680 = vmatpush1.msra.mxu0 0.0
    %1681 = vmatprep.subr.mxu0 0.0
    %1682 = vmatpush1.msra.mxu0 0.0
    %1683 = vmatprep.subr.mxu0 0.0
    %1684 = vmatpush1.msra.mxu0 %v362
    %1685 = vmatprep.subr.mxu0 0.0
    %1686 = vmatpush1.msra.mxu0 %v361
    %1687 = vmatprep.subr.mxu0 0.0
    %1688 = vmatpush2.msra.mxu0 0.0
    %1689 = vmatprep.subr.mxu0 0.0
    %1690 = vmatpush2.msra.mxu0 0.0
    %1691 = vmatprep.subr.mxu0 0.0
    %1692 = vmatpush2.msra.mxu0 0.0
    %1693 = vmatprep.subr.mxu0 0.0
    %1694 = vmatpush2.msra.mxu0 0.0
    %1695 = vmatprep.subr.mxu0 0.0
    %1696 = vmatpush2.msra.mxu0 0.0
    %1697 = vmatprep.subr.mxu0 0.0
    %1698 = vmatpush2.msra.mxu0 0.0
    %1699 = vmatprep.subr.mxu0 0.0
    %1700 = vmatpush2.msra.mxu0 0.0
    %1701 = vmatprep.subr.mxu0 0.0
    %1702 = vmatpush2.msra.mxu0 0.0
    %1703 = vmatprep.subr.mxu0 0.0
    %1704 = vmatpush2.msra.mxu0 0.0
    %1705 = vmatprep.subr.mxu0 0.0
    %1706 = vmatpush2.msra.mxu0 0.0
    %1707 = vmatprep.subr.mxu0 0.0
    %1708 = vmatpush2.msra.mxu0 0.0
    %1709 = vmatprep.subr.mxu0 0.0
    %1710 = vmatpush2.msra.mxu0 0.0
    %1711 = vmatprep.subr.mxu0 0.0
    %1712 = vmatpush2.msra.mxu0 0.0
    %1713 = vmatprep.subr.mxu0 0.0
    %1714 = vmatpush2.msra.mxu0 0.0
    %1715 = vmatprep.subr.mxu0 0.0
    %1716 = vmatpush2.msra.mxu0 0.0
    %1717 = vmatprep.subr.mxu0 0.0
    %1718 = vmatpush2.msra.mxu0 0.0
    %1719 = vmatprep.mubr.f32.mxu0 0.0
    %1720 = vmatmul.mubr.f32.gmra.mxu0 %v1653
    %v1721 = vpop.f32.mrf.mxu0
    %v1722 = vadd.f32 0.0, %v1721
    %v1723 = vpop.f32.mrf.mxu0
    %1724 = vdwg.mxu0
    %v1725 = vadd.f32 %v1649, %v1722
    %v1726 = vxor.u32 %v1725, 2147483648
    %v1727 = vmul.f32 %v1726, 1.442695
    %v1728 = vpow.pop %v1727
    %v1729 = vadd.f32 %v1728, 1.0
    %v1730 = vrcp.pop %v1729
    %v1731 = vmul.f32 1.0, %v1730
    %v1732 = vtanh.pop %v1725
    %v1733 = vmul.f32 %v1731, %v1645
    %1735 = vrot.lane.b32.xlu0 %v1732, 96
    %v1736 = vpop.permute.xlu0 %1735
    %v1738 = vmul.f32 %v1731, %v1736
    %1740 = vrot.lane.b32.xlu0 %v1738, 16
    %v1741 = vpop.permute.xlu0 %1740
    %v1743 = vadd.f32 %v1733, %v1741
    %v1744 = vtanh.pop %v1743
    %1746 = vrot.lane.b32.xlu0 %v1744, 32
    %v1747 = vpop.permute.xlu0 %1746
    %v1749 = vmul.f32 %v1731, %v1747
    %v1750 = vld [vmem:[#allocation3] sm:$0xff]
    %1752 = vrot.lane.b32.xlu0 %v1646, 80
    %v1753 = vpop.permute.xlu0 %1752
    %v1754 = vsel %vm366, %v1753, 0
    %1756 = vmatprep.subr.mxu0 0.0
    %1757 = vmatpush1.msra.mxu0 0.0
    %1758 = vmatprep.subr.mxu0 0.0
    %1759 = vmatpush1.msra.mxu0 0.0
    %1760 = vmatprep.subr.mxu0 0.0
    %1761 = vmatpush1.msra.mxu0 0.0
    %1762 = vmatprep.subr.mxu0 0.0
    %1763 = vmatpush1.msra.mxu0 0.0
    %1764 = vmatprep.subr.mxu0 0.0
    %1765 = vmatpush1.msra.mxu0 0.0
    %1766 = vmatprep.subr.mxu0 0.0
    %1767 = vmatpush1.msra.mxu0 0.0
    %1768 = vmatprep.subr.mxu0 0.0
    %1769 = vmatpush1.msra.mxu0 0.0
    %1770 = vmatprep.subr.mxu0 0.0
    %1771 = vmatpush1.msra.mxu0 0.0
    %1772 = vmatprep.subr.mxu0 0.0
    %1773 = vmatpush1.msra.mxu0 0.0
    %1774 = vmatprep.subr.mxu0 0.0
    %1775 = vmatpush1.msra.mxu0 0.0
    %1776 = vmatprep.subr.mxu0 0.0
    %1777 = vmatpush1.msra.mxu0 0.0
    %1778 = vmatprep.subr.mxu0 0.0
    %1779 = vmatpush1.msra.mxu0 0.0
    %1780 = vmatprep.subr.mxu0 0.0
    %1781 = vmatpush1.msra.mxu0 0.0
    %1782 = vmatprep.subr.mxu0 0.0
    %1783 = vmatpush1.msra.mxu0 0.0
    %1784 = vmatprep.subr.mxu0 0.0
    %1785 = vmatpush1.msra.mxu0 %v364
    %1786 = vmatprep.subr.mxu0 0.0
    %1787 = vmatpush1.msra.mxu0 %v363
    %1788 = vmatprep.subr.mxu0 0.0
    %1789 = vmatpush2.msra.mxu0 0.0
    %1790 = vmatprep.subr.mxu0 0.0
    %1791 = vmatpush2.msra.mxu0 0.0
    %1792 = vmatprep.subr.mxu0 0.0
    %1793 = vmatpush2.msra.mxu0 0.0
    %1794 = vmatprep.subr.mxu0 0.0
    %1795 = vmatpush2.msra.mxu0 0.0
    %1796 = vmatprep.subr.mxu0 0.0
    %1797 = vmatpush2.msra.mxu0 0.0
    %1798 = vmatprep.subr.mxu0 0.0
    %1799 = vmatpush2.msra.mxu0 0.0
    %1800 = vmatprep.subr.mxu0 0.0
    %1801 = vmatpush2.msra.mxu0 0.0
    %1802 = vmatprep.subr.mxu0 0.0
    %1803 = vmatpush2.msra.mxu0 0.0
    %1804 = vmatprep.subr.mxu0 0.0
    %1805 = vmatpush2.msra.mxu0 0.0
    %1806 = vmatprep.subr.mxu0 0.0
    %1807 = vmatpush2.msra.mxu0 0.0
    %1808 = vmatprep.subr.mxu0 0.0
    %1809 = vmatpush2.msra.mxu0 0.0
    %1810 = vmatprep.subr.mxu0 0.0
    %1811 = vmatpush2.msra.mxu0 0.0
    %1812 = vmatprep.subr.mxu0 0.0
    %1813 = vmatpush2.msra.mxu0 0.0
    %1814 = vmatprep.subr.mxu0 0.0
    %1815 = vmatpush2.msra.mxu0 0.0
    %1816 = vmatprep.subr.mxu0 0.0
    %1817 = vmatpush2.msra.mxu0 0.0
    %1818 = vmatprep.subr.mxu0 0.0
    %1819 = vmatpush2.msra.mxu0 0.0
    %1820 = vmatprep.mubr.f32.mxu0 0.0
    %1821 = vmatmul.mubr.f32.gmra.mxu0 %v1754
    %v1822 = vpop.f32.mrf.mxu0
    %v1823 = vadd.f32 0.0, %v1822
    %v1824 = vpop.f32.mrf.mxu0
    %1825 = vdwg.mxu0
    %v1826 = vadd.f32 %v1750, %v1823
    %v1827 = vxor.u32 %v1826, 2147483648
    %v1828 = vmul.f32 %v1827, 1.442695
    %v1829 = vpow.pop %v1828
    %v1830 = vadd.f32 %v1829, 1.0
    %v1831 = vrcp.pop %v1830
    %v1832 = vmul.f32 1.0, %v1831
    %v1833 = vtanh.pop %v1826
    %v1834 = vmul.f32 %v1832, %v1647
    %1836 = vrot.lane.b32.xlu0 %v1833, 96
    %v1837 = vpop.permute.xlu0 %1836
    %v1839 = vmul.f32 %v1832, %v1837
    %1841 = vrot.lane.b32.xlu0 %v1839, 16
    %v1842 = vpop.permute.xlu0 %1841
    %v1844 = vadd.f32 %v1834, %v1842
    %v1845 = vtanh.pop %v1844
    %1847 = vrot.lane.b32.xlu0 %v1845, 32
    %v1848 = vpop.permute.xlu0 %1847
    %v1850 = vmul.f32 %v1832, %v1848
    %v1851 = vsel %vm575, %v1749, %v1644
    %v1852 = vsel %vm568, %v1850, %v1646
    %v1853 = vld [vmem:[#allocation12] sm:$0xff]
    %v1854 = vld [vmem:[#allocation12 + $0x8] sm:$0xff]
    %s1855 = scalar_lea.vmem [#allocation12], 16
    %v1856 = vld [vmem:[%s1855] sm:$0xff]
    %v1857 = vld [vmem:[%s1855 + $0x8] sm:$0xff]
    %1859 = vrot.lane.b32.xlu0 %v1852, 80
    %v1860 = vpop.permute.xlu0 %1859
    %v1861 = vsel %vm366, %v1860, 0
    %1863 = vmatprep.subr.mxu0 0.0
    %1864 = vmatpush1.msra.mxu0 0.0
    %1865 = vmatprep.subr.mxu0 0.0
    %1866 = vmatpush1.msra.mxu0 0.0
    %1867 = vmatprep.subr.mxu0 0.0
    %1868 = vmatpush1.msra.mxu0 0.0
    %1869 = vmatprep.subr.mxu0 0.0
    %1870 = vmatpush1.msra.mxu0 0.0
    %1871 = vmatprep.subr.mxu0 0.0
    %1872 = vmatpush1.msra.mxu0 0.0
    %1873 = vmatprep.subr.mxu0 0.0
    %1874 = vmatpush1.msra.mxu0 0.0
    %1875 = vmatprep.subr.mxu0 0.0
    %1876 = vmatpush1.msra.mxu0 0.0
    %1877 = vmatprep.subr.mxu0 0.0
    %1878 = vmatpush1.msra.mxu0 0.0
    %1879 = vmatprep.subr.mxu0 0.0
    %1880 = vmatpush1.msra.mxu0 0.0
    %1881 = vmatprep.subr.mxu0 0.0
    %1882 = vmatpush1.msra.mxu0 0.0
    %1883 = vmatprep.subr.mxu0 0.0
    %1884 = vmatpush1.msra.mxu0 0.0
    %1885 = vmatprep.subr.mxu0 0.0
    %1886 = vmatpush1.msra.mxu0 0.0
    %1887 = vmatprep.subr.mxu0 0.0
    %1888 = vmatpush1.msra.mxu0 0.0
    %1889 = vmatprep.subr.mxu0 0.0
    %1890 = vmatpush1.msra.mxu0 0.0
    %1891 = vmatprep.subr.mxu0 0.0
    %1892 = vmatpush1.msra.mxu0 %v1857
    %1893 = vmatprep.subr.mxu0 0.0
    %1894 = vmatpush1.msra.mxu0 %v1856
    %1895 = vmatprep.subr.mxu0 0.0
    %1896 = vmatpush2.msra.mxu0 0.0
    %1897 = vmatprep.subr.mxu0 0.0
    %1898 = vmatpush2.msra.mxu0 0.0
    %1899 = vmatprep.subr.mxu0 0.0
    %1900 = vmatpush2.msra.mxu0 0.0
    %1901 = vmatprep.subr.mxu0 0.0
    %1902 = vmatpush2.msra.mxu0 0.0
    %1903 = vmatprep.subr.mxu0 0.0
    %1904 = vmatpush2.msra.mxu0 0.0
    %1905 = vmatprep.subr.mxu0 0.0
    %1906 = vmatpush2.msra.mxu0 0.0
    %1907 = vmatprep.subr.mxu0 0.0
    %1908 = vmatpush2.msra.mxu0 0.0
    %1909 = vmatprep.subr.mxu0 0.0
    %1910 = vmatpush2.msra.mxu0 0.0
    %1911 = vmatprep.subr.mxu0 0.0
    %1912 = vmatpush2.msra.mxu0 0.0
    %1913 = vmatprep.subr.mxu0 0.0
    %1914 = vmatpush2.msra.mxu0 0.0
    %1915 = vmatprep.subr.mxu0 0.0
    %1916 = vmatpush2.msra.mxu0 0.0
    %1917 = vmatprep.subr.mxu0 0.0
    %1918 = vmatpush2.msra.mxu0 0.0
    %1919 = vmatprep.subr.mxu0 0.0
    %1920 = vmatpush2.msra.mxu0 0.0
    %1921 = vmatprep.subr.mxu0 0.0
    %1922 = vmatpush2.msra.mxu0 0.0
    %1923 = vmatprep.subr.mxu0 0.0
    %1924 = vmatpush2.msra.mxu0 0.0
    %1925 = vmatprep.subr.mxu0 0.0
    %1926 = vmatpush2.msra.mxu0 0.0
    %1927 = vmatprep.mubr.f32.mxu0 0.0
    %1928 = vmatmul.mubr.f32.gmra.mxu0 %v1861
    %v1929 = vpop.f32.mrf.mxu0
    %v1930 = vadd.f32 0.0, %v1929
    %v1931 = vpop.f32.mrf.mxu0
    %1932 = vdwg.mxu0
    %1934 = vrot.lane.b32.xlu0 %v1851, 80
    %v1935 = vpop.permute.xlu0 %1934
    %v1936 = vsel %vm366, %v1935, 0
    %1938 = vmatprep.subr.mxu0 0.0
    %1939 = vmatpush1.msra.mxu0 0.0
    %1940 = vmatprep.subr.mxu0 0.0
    %1941 = vmatpush1.msra.mxu0 0.0
    %1942 = vmatprep.subr.mxu0 0.0
    %1943 = vmatpush1.msra.mxu0 0.0
    %1944 = vmatprep.subr.mxu0 0.0
    %1945 = vmatpush1.msra.mxu0 0.0
    %1946 = vmatprep.subr.mxu0 0.0
    %1947 = vmatpush1.msra.mxu0 0.0
    %1948 = vmatprep.subr.mxu0 0.0
    %1949 = vmatpush1.msra.mxu0 0.0
    %1950 = vmatprep.subr.mxu0 0.0
    %1951 = vmatpush1.msra.mxu0 0.0
    %1952 = vmatprep.subr.mxu0 0.0
    %1953 = vmatpush1.msra.mxu0 0.0
    %1954 = vmatprep.subr.mxu0 0.0
    %1955 = vmatpush1.msra.mxu0 0.0
    %1956 = vmatprep.subr.mxu0 0.0
    %1957 = vmatpush1.msra.mxu0 0.0
    %1958 = vmatprep.subr.mxu0 0.0
    %1959 = vmatpush1.msra.mxu0 0.0
    %1960 = vmatprep.subr.mxu0 0.0
    %1961 = vmatpush1.msra.mxu0 0.0
    %1962 = vmatprep.subr.mxu0 0.0
    %1963 = vmatpush1.msra.mxu0 0.0
    %1964 = vmatprep.subr.mxu0 0.0
    %1965 = vmatpush1.msra.mxu0 0.0
    %1966 = vmatprep.subr.mxu0 0.0
    %1967 = vmatpush1.msra.mxu0 %v1854
    %1968 = vmatprep.subr.mxu0 0.0
    %1969 = vmatpush1.msra.mxu0 %v1853
    %1970 = vmatprep.subr.mxu0 0.0
    %1971 = vmatpush2.msra.mxu0 0.0
    %1972 = vmatprep.subr.mxu0 0.0
    %1973 = vmatpush2.msra.mxu0 0.0
    %1974 = vmatprep.subr.mxu0 0.0
    %1975 = vmatpush2.msra.mxu0 0.0
    %1976 = vmatprep.subr.mxu0 0.0
    %1977 = vmatpush2.msra.mxu0 0.0
    %1978 = vmatprep.subr.mxu0 0.0
    %1979 = vmatpush2.msra.mxu0 0.0
    %1980 = vmatprep.subr.mxu0 0.0
    %1981 = vmatpush2.msra.mxu0 0.0
    %1982 = vmatprep.subr.mxu0 0.0
    %1983 = vmatpush2.msra.mxu0 0.0
    %1984 = vmatprep.subr.mxu0 0.0
    %1985 = vmatpush2.msra.mxu0 0.0
    %1986 = vmatprep.subr.mxu0 0.0
    %1987 = vmatpush2.msra.mxu0 0.0
    %1988 = vmatprep.subr.mxu0 0.0
    %1989 = vmatpush2.msra.mxu0 0.0
    %1990 = vmatprep.subr.mxu0 0.0
    %1991 = vmatpush2.msra.mxu0 0.0
    %1992 = vmatprep.subr.mxu0 0.0
    %1993 = vmatpush2.msra.mxu0 0.0
    %1994 = vmatprep.subr.mxu0 0.0
    %1995 = vmatpush2.msra.mxu0 0.0
    %1996 = vmatprep.subr.mxu0 0.0
    %1997 = vmatpush2.msra.mxu0 0.0
    %1998 = vmatprep.subr.mxu0 0.0
    %1999 = vmatpush2.msra.mxu0 0.0
    %2000 = vmatprep.subr.mxu0 0.0
    %2001 = vmatpush2.msra.mxu0 0.0
    %2002 = vmatprep.mubr.f32.mxu0 0.0
    %2003 = vmatmul.mubr.f32.gmra.mxu0 %v1936
    %v2004 = vpop.f32.mrf.mxu0
    %v2005 = vadd.f32 %v1930, %v2004
    %v2006 = vpop.f32.mrf.mxu0
    %2007 = vdwg.mxu0
    %v2008 = vld [vmem:[%s9] sm:$0x1]
    %v2010 = vlaneseq
    %v2011 = vshrl.u32 %v2010, 7
    %v2012 = vsub.s32 0, %v2011
    %v2013 = vrot.slane %v2008, %v2012
    %v2015 = vadd.f32 %v2005, %v2013
    %v2016 = vtanh.pop %v2015
    %2017 = vst [vmem:[#allocation13] sm:$0xff] %v2016
    // Predicated region
    $region62: #{tpu_custom_call.1} parent=1 // pred_check
      _
    $region63: #{tpu_custom_call.1} parent=1 // pred_check_branch
      %2019 = sbr.rel (0) target = $region65
    $region64: #{tpu_custom_call.1} parent=1 // pred_region
      %s2021 = ssub.s32 128, 128
      %2022 = vsyncadd [#allocation6], %s2021
      %s2024 = sshll.u32 [#allocation13], 4
      %s2025 = int_to_ptr.vmem [resolvable:$true] %s2024
      %2027 = dma.vmem_to_hbm [thread:$0]  %s2025, 128, %s10, [#allocation6]
    $region65: #{tpu_custom_call.1} parent=1 // pred_fallthru
      _
    // Predicated region
    $region66: #{tpu_custom_call.1} parent=1 // pred_check
      _
    $region67: #{tpu_custom_call.1} parent=1 // pred_check_branch
      %2029 = sbr.rel (0) target = $region69
    $region68: #{tpu_custom_call.1} parent=1 // pred_region
      %2030 = dma.done [#allocation6], 128
    $region69: #{tpu_custom_call.1} parent=1 // pred_fallthru
      _
    %2031 = vsyncpa [#allocation5], 1
    %2032 = vsyncpa [#allocation8], 1
    %2033 = vsyncpa [#allocation11], 1
    %2034 = vsyncpa [#allocation6], 1

</llo_original>
